<compile_context>
chip_gen: v7x
topology: tpu7x:2x2x1
jax: 0.10.0
libtpu: 0.0.40
codegen_flags: <defaults>
</compile_context>

<pallas_src>
import math

import jax
import jax.numpy as jnp
import numpy as np
from jax.experimental import pallas as pl
from jax.experimental.pallas import tpu as pltpu


# ---------------------------------------------------------------------------
# Kernel
# ---------------------------------------------------------------------------
def _make_bilstm_kernel(T, B, H):
    """Fused bidirectional LSTM + output Linear; single invocation, all in VMEM."""
    G = 2 * H  # per-gate width: [forward H | reverse H]

    def kernel(x_ref,        # (T*B, 2*nIn)  row block t = [x_t | x_{T-1-t}]
               w_ih_ref,     # (2*nIn, 8H)   gate-interleaved, per-direction block structure
               w_hh_ref,     # (2H, 8H)      gate-interleaved block-diagonal
               b_ref,        # (1, 8H)
               w_emb_ref,    # (2H, nOut_pad)
               b_emb_ref,    # (1, nOut_pad)
               out_ref,      # (T*B, nOut_pad)  lane-dense
               pre_ref,      # (T*B, 8H) scratch
               h2_ref):      # (T*B, 2H) scratch: [h_f | h_r], time-aligned
        # Fused hoisted input projection for BOTH directions: one GEMM, bias added once.
        pre_ref[...] = (
            jnp.dot(x_ref[...], w_ih_ref[...], preferred_element_type=jnp.float32)
            + b_ref[...])

        # Hoist the recurrent weight load out of the serial loop.
        w_hh = w_hh_ref[...]                                  # (2H, 8H)

        h = jnp.zeros((B, 2 * H), jnp.float32)                # [h_f | h_r]
        c = jnp.zeros((B, 2 * H), jnp.float32)                # [c_f | c_r]

        # Statically unrolled recurrence (T is small); all slices are static.
        for t in range(T):
            pre_t = pre_ref[t * B:(t + 1) * B, :]             # (B, 8H), one row block

            # Single merged recurrent matmul for both directions (block-diag W_hh).
            g_all = pre_t + jnp.dot(h, w_hh, preferred_element_type=jnp.float32)

            # Full-width EUP nonlinearities on the packed gates, then slice.
            sig = jax.nn.sigmoid(g_all)
            tah = jnp.tanh(g_all)
            i_g = sig[:, 0 * G:1 * G]
            f_g = sig[:, 1 * G:2 * G]
            g_g = tah[:, 2 * G:3 * G]
            o_g = sig[:, 3 * G:4 * G]

            c = f_g * c + i_g * g_g
            h = o_g * jnp.tanh(c)

            # Forward half is time t; reverse half corresponds to time T-1-t.
            tr = T - 1 - t
            h2_ref[t * B:(t + 1) * B, 0:H] = h[:, 0:H]
            h2_ref[tr * B:(tr + 1) * B, H:2 * H] = h[:, H:2 * H]

        # Fused embedding epilogue on the VMEM-resident hidden states:
        # single lane-dense (T*B, 2H) @ (2H, nOut_pad) matmul.
        out = (jnp.dot(h2_ref[...], w_emb_ref[...],
                       preferred_element_type=jnp.float32)
               + b_emb_ref[...])
        out_ref[...] = out.astype(out_ref.dtype)

    return kernel


# ---------------------------------------------------------------------------
# Wrapper
# ---------------------------------------------------------------------------
def bidirectional_lstm_forward(x, params, nOut):
    T, B, nIn = x.shape
    H = params["w_hh"].shape[0] // 2
    nOut_pad = params["b_emb"].shape[1]

    # Plain-XLA glue: build the time-aligned input for the merged recurrence.
    # Row block t holds [x_t | x_{T-1-t}]; the duplicated copy is trivial traffic
    # and lets the fused input GEMM produce a pre buffer that each merged step
    # reads as one contiguous row block.
    x_fwd = x.reshape(T * B, nIn)
    x_rev = x[::-1].reshape(T * B, nIn)
    x_cat = jnp.concatenate([x_fwd, x_rev], axis=1)           # (T*B, 2*nIn)

    out2d = pl.pallas_call(
        _make_bilstm_kernel(T, B, H),
        out_shape=jax.ShapeDtypeStruct((T * B, nOut_pad), jnp.float32),
        scratch_shapes=[
            pltpu.VMEM((T * B, 8 * H), jnp.float32),   # merged pre-activations
            pltpu.VMEM((T * B, 2 * H), jnp.float32),   # combined hidden states
        ],
        compiler_params=pltpu.CompilerParams(
            vmem_limit_bytes=32 * 1024 * 1024),
    )(x_cat, params["w_ih"], params["w_hh"], params["b"],
      params["w_emb"], params["b_emb"])

    # Slice the lane padding off and restore (T, B, nOut).
    return out2d[:, :nOut].reshape(T, B, nOut)


# ---------------------------------------------------------------------------
# Parameter construction (PyTorch-shaped raw params -> merged/packed kernel params)
# ---------------------------------------------------------------------------
def init_raw_params(key, nIn, H, nOut):
    ks = jax.random.split(key, 10)
    s = 1.0 / math.sqrt(H)
    u = lambda k, shape: jax.random.uniform(k, shape, jnp.float32, -s, s)
    return {
        "weight_ih_l0": u(ks[0], (4 * H, nIn)),
        "weight_hh_l0": u(ks[1], (4 * H, H)),
        "bias_ih_l0":   u(ks[2], (4 * H,)),
        "bias_hh_l0":   u(ks[3], (4 * H,)),
        "weight_ih_l0_rev": u(ks[4], (4 * H, nIn)),
        "weight_hh_l0_rev": u(ks[5], (4 * H, H)),
        "bias_ih_l0_rev":   u(ks[6], (4 * H,)),
        "bias_hh_l0_rev":   u(ks[7], (4 * H,)),
        "emb_weight": u(ks[8], (nOut, 2 * H)),
        "emb_bias":   u(ks[9], (nOut,)),
    }


def pack_params(raw, nIn, H, nOut):
    """Build merged gate-interleaved weights.

    Column layout of the 8H gate axis: (gate k in i,f,g,o) x (dir: fwd, rev) x H,
    i.e. [i_f i_r | f_f f_r | g_f g_r | o_f o_r].
    """
    def gi_ih(w_f, w_r):
        # (4H, nIn) PyTorch layout -> (2*nIn, 8H); fwd x rows see only fwd columns.
        wf = jnp.transpose(w_f.reshape(4, H, nIn), (2, 0, 1))   # (nIn, 4, H)
        wr = jnp.transpose(w_r.reshape(4, H, nIn), (2, 0, 1))
        out = jnp.zeros((2 * nIn, 4, 2, H), jnp.float32)
        out = out.at[:nIn, :, 0, :].set(wf)
        out = out.at[nIn:, :, 1, :].set(wr)
        return out.reshape(2 * nIn, 8 * H)

    def gi_hh(w_f, w_r):
        # (4H, H) -> (2H, 8H) block-diagonal over directions, per gate block.
        wf = jnp.transpose(w_f.reshape(4, H, H), (2, 0, 1))     # (H, 4, H)
        wr = jnp.transpose(w_r.reshape(4, H, H), (2, 0, 1))
        out = jnp.zeros((2 * H, 4, 2, H), jnp.float32)
        out = out.at[:H, :, 0, :].set(wf)
        out = out.at[H:, :, 1, :].set(wr)
        return out.reshape(2 * H, 8 * H)

    def gi_b(b_f, b_r):
        return jnp.stack([b_f.reshape(4, H), b_r.reshape(4, H)],
                         axis=1).reshape(1, 8 * H)

    # Lane-dense (padded) embedding weights: cat([hf,hr],-1) @ W.T + b.
    nOut_pad = ((nOut + 127) // 128) * 128
    w_emb = jnp.zeros((2 * H, nOut_pad), jnp.float32)
    w_emb = w_emb.at[:, :nOut].set(raw["emb_weight"].T)         # (2H, nOut)
    b_emb = jnp.zeros((1, nOut_pad), jnp.float32)
    b_emb = b_emb.at[0, :nOut].set(raw["emb_bias"])

    return {
        "w_ih": gi_ih(raw["weight_ih_l0"], raw["weight_ih_l0_rev"]),
        "w_hh": gi_hh(raw["weight_hh_l0"], raw["weight_hh_l0_rev"]),
        "b":    gi_b(raw["bias_ih_l0"] + raw["bias_hh_l0"],
                     raw["bias_ih_l0_rev"] + raw["bias_hh_l0_rev"]),
        "w_emb": w_emb,
        "b_emb": b_emb,
    }


# ---------------------------------------------------------------------------
# Pure-JAX reference (PyTorch semantics) for validation
# ---------------------------------------------------------------------------
def ref_forward(x, raw):
    T, B, _ = x.shape
    H = raw["weight_hh_l0"].shape[1]
    hp = jax.lax.Precision.HIGHEST

    def run(xseq, w_ih, w_hh, b_ih, b_hh):
        wih_t, whh_t, b = w_ih.T, w_hh.T, b_ih + b_hh

        def step(carry, xt):
            h, c = carry
            g = (jnp.dot(xt, wih_t, precision=hp)
                 + jnp.dot(h, whh_t, precision=hp) + b)
            i = jax.nn.sigmoid(g[:, 0:H])
            f = jax.nn.sigmoid(g[:, H:2 * H])
            gg = jnp.tanh(g[:, 2 * H:3 * H])
            o = jax.nn.sigmoid(g[:, 3 * H:4 * H])
            c = f * c + i * gg
            h = o * jnp.tanh(c)
            return (h, c), h

        init = (jnp.zeros((B, H), jnp.float32), jnp.zeros((B, H), jnp.float32))
        _, hs = jax.lax.scan(step, init, xseq)
        return hs

    hf = run(x, raw["weight_ih_l0"], raw["weight_hh_l0"],
             raw["bias_ih_l0"], raw["bias_hh_l0"])
    hr = run(x[::-1], raw["weight_ih_l0_rev"], raw["weight_hh_l0_rev"],
             raw["bias_ih_l0_rev"], raw["bias_hh_l0_rev"])[::-1]
    rec = jnp.concatenate([hf, hr], axis=-1)                  # (T, B, 2H)
    flat = rec.reshape(T * B, 2 * H)
    out = jnp.dot(flat, raw["emb_weight"].T, precision=hp) + raw["emb_bias"]
    return out.reshape(T, B, -1)


# ---------------------------------------------------------------------------
if __name__ == "__main__":
    T, B, nIn, H, nOut = 8, 2, 16, 32, 8

    key = jax.random.PRNGKey(0)
    kx, kp = jax.random.split(key)
    x = jax.random.normal(kx, (T, B, nIn), dtype=jnp.float32)

    raw = init_raw_params(kp, nIn, H, nOut)
    params = pack_params(raw, nIn, H, nOut)

    out = bidirectional_lstm_forward(x, params, nOut)
    out = jax.block_until_ready(out)

    ref = ref_forward(x, raw)
    np.testing.assert_allclose(np.asarray(out), np.asarray(ref),
                               atol=1e-5, rtol=1e-4)
    print("KERNEL_OK")
</pallas_src>

<mosaic_0001>
module attributes {stable_mosaic.version = 11 : i64} {
  func.func @kernel(%arg0: memref<16x32xf32, #tpu.memory_space<vmem>>, %arg1: memref<32x256xf32, #tpu.memory_space<vmem>>, %arg2: memref<64x256xf32, #tpu.memory_space<vmem>>, %arg3: memref<1x256xf32, #tpu.memory_space<vmem>>, %arg4: memref<64x128xf32, #tpu.memory_space<vmem>>, %arg5: memref<1x128xf32, #tpu.memory_space<vmem>>, %arg6: memref<16x128xf32, #tpu.memory_space<vmem>>, %arg7: memref<16x256xf32, #tpu.memory_space<vmem>>, %arg8: memref<16x64xf32, #tpu.memory_space<vmem>>) attributes {dimension_semantics = [], scalar_prefetch = 0 : i64, scratch_operands = 2 : i64, tpu.core_type = #tpu.core_type<tc>} {
    %c0 = arith.constant 0 : index
    %c0_0 = arith.constant 0 : index
    %0 = vector.load %arg0[%c0, %c0_0] : memref<16x32xf32, #tpu.memory_space<vmem>>, vector<16x32xf32>
    %c0_1 = arith.constant 0 : index
    %c0_2 = arith.constant 0 : index
    %1 = vector.load %arg1[%c0_1, %c0_2] : memref<32x256xf32, #tpu.memory_space<vmem>>, vector<32x256xf32>
    %cst = arith.constant dense<0.000000e+00> : vector<16x256xf32>
    %2 = tpu.matmul %0, %1, %cst {dimension_numbers = #tpu.dot_dimension_numbers<[1], [0], [0], [1], [0, 0, 1, 1], [], []>} : vector<16x32xf32>, vector<32x256xf32>, vector<16x256xf32> -> vector<16x256xf32>
    %c0_3 = arith.constant 0 : index
    %c0_4 = arith.constant 0 : index
    %3 = vector.load %arg3[%c0_3, %c0_4] : memref<1x256xf32, #tpu.memory_space<vmem>>, vector<1x256xf32>
    %4 = vector.broadcast %3 : vector<1x256xf32> to vector<16x256xf32>
    %5 = arith.addf %2, %4 : vector<16x256xf32>
    %c0_5 = arith.constant 0 : index
    %c0_6 = arith.constant 0 : index
    %6 = vector.load %arg7[%c0_5, %c0_6] : memref<16x256xf32, #tpu.memory_space<vmem>>, vector<16x256xf32>
    tpu.vector_store %arg7[%c0_5, %c0_6], %5 {strides = array<i32>} : memref<16x256xf32, #tpu.memory_space<vmem>>, vector<16x256xf32>,
    %c0_7 = arith.constant 0 : index
    %c0_8 = arith.constant 0 : index
    %7 = vector.load %arg2[%c0_7, %c0_8] : memref<64x256xf32, #tpu.memory_space<vmem>>, vector<64x256xf32>
    %cst_9 = arith.constant 0.000000e+00 : f32
    %8 = vector.broadcast %cst_9 : f32 to vector<2x64xf32>
    %cst_10 = arith.constant 0.000000e+00 : f32
    %9 = vector.broadcast %cst_10 : f32 to vector<2x64xf32>
    %c0_11 = arith.constant 0 : index
    %c0_12 = arith.constant 0 : index
    %10 = vector.load %arg7[%c0_11, %c0_12] : memref<16x256xf32, #tpu.memory_space<vmem>>, vector<2x256xf32>
    %cst_13 = arith.constant dense<0.000000e+00> : vector<2x256xf32>
    %11 = tpu.matmul %8, %7, %cst_13 {dimension_numbers = #tpu.dot_dimension_numbers<[1], [0], [0], [1], [0, 0, 1, 1], [], []>} : vector<2x64xf32>, vector<64x256xf32>, vector<2x256xf32> -> vector<2x256xf32>
    %12 = arith.addf %10, %11 : vector<2x256xf32>
    %13 = arith.negf %12 : vector<2x256xf32>
    %14 = math.exp %13 : vector<2x256xf32>
    %cst_14 = arith.constant 1.000000e+00 : f32
    %15 = vector.broadcast %cst_14 : f32 to vector<2x256xf32>
    %16 = arith.addf %15, %14 : vector<2x256xf32>
    %17 = arith.divf %15, %16 : vector<2x256xf32>
    %18 = math.tanh %12 : vector<2x256xf32>
    %19 = vector.extract_strided_slice %17 {offsets = [0, 0], sizes = [2, 64], strides = [1, 1]} : vector<2x256xf32> to vector<2x64xf32>
    %20 = vector.extract_strided_slice %17 {offsets = [0, 64], sizes = [2, 64], strides = [1, 1]} : vector<2x256xf32> to vector<2x64xf32>
    %21 = vector.extract_strided_slice %18 {offsets = [0, 128], sizes = [2, 64], strides = [1, 1]} : vector<2x256xf32> to vector<2x64xf32>
    %22 = vector.extract_strided_slice %17 {offsets = [0, 192], sizes = [2, 64], strides = [1, 1]} : vector<2x256xf32> to vector<2x64xf32>
    %23 = arith.mulf %20, %9 : vector<2x64xf32>
    %24 = arith.mulf %19, %21 : vector<2x64xf32>
    %25 = arith.addf %23, %24 : vector<2x64xf32>
    %26 = math.tanh %25 : vector<2x64xf32>
    %27 = arith.mulf %22, %26 : vector<2x64xf32>
    %28 = vector.extract_strided_slice %27 {offsets = [0, 0], sizes = [2, 32], strides = [1, 1]} : vector<2x64xf32> to vector<2x32xf32>
    %c0_15 = arith.constant 0 : index
    %c0_16 = arith.constant 0 : index
    %29 = vector.load %arg8[%c0_15, %c0_16] : memref<16x64xf32, #tpu.memory_space<vmem>>, vector<2x32xf32>
    tpu.vector_store %arg8[%c0_15, %c0_16], %28 {strides = array<i32>} : memref<16x64xf32, #tpu.memory_space<vmem>>, vector<2x32xf32>,
    %30 = vector.extract_strided_slice %27 {offsets = [0, 32], sizes = [2, 32], strides = [1, 1]} : vector<2x64xf32> to vector<2x32xf32>
    %c14 = arith.constant 14 : index
    %c32 = arith.constant 32 : index
    %31 = vector.load %arg8[%c14, %c32] : memref<16x64xf32, #tpu.memory_space<vmem>>, vector<2x32xf32>
    tpu.vector_store %arg8[%c14, %c32], %30 {strides = array<i32>} : memref<16x64xf32, #tpu.memory_space<vmem>>, vector<2x32xf32>,
    %c2 = arith.constant 2 : index
    %c0_17 = arith.constant 0 : index
    %32 = vector.load %arg7[%c2, %c0_17] : memref<16x256xf32, #tpu.memory_space<vmem>>, vector<2x256xf32>
    %cst_18 = arith.constant dense<0.000000e+00> : vector<2x256xf32>
    %33 = tpu.matmul %27, %7, %cst_18 {dimension_numbers = #tpu.dot_dimension_numbers<[1], [0], [0], [1], [0, 0, 1, 1], [], []>} : vector<2x64xf32>, vector<64x256xf32>, vector<2x256xf32> -> vector<2x256xf32>
    %34 = arith.addf %32, %33 : vector<2x256xf32>
    %35 = arith.negf %34 : vector<2x256xf32>
    %36 = math.exp %35 : vector<2x256xf32>
    %cst_19 = arith.constant 1.000000e+00 : f32
    %37 = vector.broadcast %cst_19 : f32 to vector<2x256xf32>
    %38 = arith.addf %37, %36 : vector<2x256xf32>
    %39 = arith.divf %37, %38 : vector<2x256xf32>
    %40 = math.tanh %34 : vector<2x256xf32>
    %41 = vector.extract_strided_slice %39 {offsets = [0, 0], sizes = [2, 64], strides = [1, 1]} : vector<2x256xf32> to vector<2x64xf32>
    %42 = vector.extract_strided_slice %39 {offsets = [0, 64], sizes = [2, 64], strides = [1, 1]} : vector<2x256xf32> to vector<2x64xf32>
    %43 = vector.extract_strided_slice %40 {offsets = [0, 128], sizes = [2, 64], strides = [1, 1]} : vector<2x256xf32> to vector<2x64xf32>
    %44 = vector.extract_strided_slice %39 {offsets = [0, 192], sizes = [2, 64], strides = [1, 1]} : vector<2x256xf32> to vector<2x64xf32>
    %45 = arith.mulf %42, %25 : vector<2x64xf32>
    %46 = arith.mulf %41, %43 : vector<2x64xf32>
    %47 = arith.addf %45, %46 : vector<2x64xf32>
    %48 = math.tanh %47 : vector<2x64xf32>
    %49 = arith.mulf %44, %48 : vector<2x64xf32>
    %50 = vector.extract_strided_slice %49 {offsets = [0, 0], sizes = [2, 32], strides = [1, 1]} : vector<2x64xf32> to vector<2x32xf32>
    %c2_20 = arith.constant 2 : index
    %c0_21 = arith.constant 0 : index
    %51 = vector.load %arg8[%c2_20, %c0_21] : memref<16x64xf32, #tpu.memory_space<vmem>>, vector<2x32xf32>
    tpu.vector_store %arg8[%c2_20, %c0_21], %50 {strides = array<i32>} : memref<16x64xf32, #tpu.memory_space<vmem>>, vector<2x32xf32>,
    %52 = vector.extract_strided_slice %49 {offsets = [0, 32], sizes = [2, 32], strides = [1, 1]} : vector<2x64xf32> to vector<2x32xf32>
    %c12 = arith.constant 12 : index
    %c32_22 = arith.constant 32 : index
    %53 = vector.load %arg8[%c12, %c32_22] : memref<16x64xf32, #tpu.memory_space<vmem>>, vector<2x32xf32>
    tpu.vector_store %arg8[%c12, %c32_22], %52 {strides = array<i32>} : memref<16x64xf32, #tpu.memory_space<vmem>>, vector<2x32xf32>,
    %c4 = arith.constant 4 : index
    %c0_23 = arith.constant 0 : index
    %54 = vector.load %arg7[%c4, %c0_23] : memref<16x256xf32, #tpu.memory_space<vmem>>, vector<2x256xf32>
    %cst_24 = arith.constant dense<0.000000e+00> : vector<2x256xf32>
    %55 = tpu.matmul %49, %7, %cst_24 {dimension_numbers = #tpu.dot_dimension_numbers<[1], [0], [0], [1], [0, 0, 1, 1], [], []>} : vector<2x64xf32>, vector<64x256xf32>, vector<2x256xf32> -> vector<2x256xf32>
    %56 = arith.addf %54, %55 : vector<2x256xf32>
    %57 = arith.negf %56 : vector<2x256xf32>
    %58 = math.exp %57 : vector<2x256xf32>
    %cst_25 = arith.constant 1.000000e+00 : f32
    %59 = vector.broadcast %cst_25 : f32 to vector<2x256xf32>
    %60 = arith.addf %59, %58 : vector<2x256xf32>
    %61 = arith.divf %59, %60 : vector<2x256xf32>
    %62 = math.tanh %56 : vector<2x256xf32>
    %63 = vector.extract_strided_slice %61 {offsets = [0, 0], sizes = [2, 64], strides = [1, 1]} : vector<2x256xf32> to vector<2x64xf32>
    %64 = vector.extract_strided_slice %61 {offsets = [0, 64], sizes = [2, 64], strides = [1, 1]} : vector<2x256xf32> to vector<2x64xf32>
    %65 = vector.extract_strided_slice %62 {offsets = [0, 128], sizes = [2, 64], strides = [1, 1]} : vector<2x256xf32> to vector<2x64xf32>
    %66 = vector.extract_strided_slice %61 {offsets = [0, 192], sizes = [2, 64], strides = [1, 1]} : vector<2x256xf32> to vector<2x64xf32>
    %67 = arith.mulf %64, %47 : vector<2x64xf32>
    %68 = arith.mulf %63, %65 : vector<2x64xf32>
    %69 = arith.addf %67, %68 : vector<2x64xf32>
    %70 = math.tanh %69 : vector<2x64xf32>
    %71 = arith.mulf %66, %70 : vector<2x64xf32>
    %72 = vector.extract_strided_slice %71 {offsets = [0, 0], sizes = [2, 32], strides = [1, 1]} : vector<2x64xf32> to vector<2x32xf32>
    %c4_26 = arith.constant 4 : index
    %c0_27 = arith.constant 0 : index
    %73 = vector.load %arg8[%c4_26, %c0_27] : memref<16x64xf32, #tpu.memory_space<vmem>>, vector<2x32xf32>
    tpu.vector_store %arg8[%c4_26, %c0_27], %72 {strides = array<i32>} : memref<16x64xf32, #tpu.memory_space<vmem>>, vector<2x32xf32>,
    %74 = vector.extract_strided_slice %71 {offsets = [0, 32], sizes = [2, 32], strides = [1, 1]} : vector<2x64xf32> to vector<2x32xf32>
    %c10 = arith.constant 10 : index
    %c32_28 = arith.constant 32 : index
    %75 = vector.load %arg8[%c10, %c32_28] : memref<16x64xf32, #tpu.memory_space<vmem>>, vector<2x32xf32>
    tpu.vector_store %arg8[%c10, %c32_28], %74 {strides = array<i32>} : memref<16x64xf32, #tpu.memory_space<vmem>>, vector<2x32xf32>,
    %c6 = arith.constant 6 : index
    %c0_29 = arith.constant 0 : index
    %76 = vector.load %arg7[%c6, %c0_29] : memref<16x256xf32, #tpu.memory_space<vmem>>, vector<2x256xf32>
    %cst_30 = arith.constant dense<0.000000e+00> : vector<2x256xf32>
    %77 = tpu.matmul %71, %7, %cst_30 {dimension_numbers = #tpu.dot_dimension_numbers<[1], [0], [0], [1], [0, 0, 1, 1], [], []>} : vector<2x64xf32>, vector<64x256xf32>, vector<2x256xf32> -> vector<2x256xf32>
    %78 = arith.addf %76, %77 : vector<2x256xf32>
    %79 = arith.negf %78 : vector<2x256xf32>
    %80 = math.exp %79 : vector<2x256xf32>
    %cst_31 = arith.constant 1.000000e+00 : f32
    %81 = vector.broadcast %cst_31 : f32 to vector<2x256xf32>
    %82 = arith.addf %81, %80 : vector<2x256xf32>
    %83 = arith.divf %81, %82 : vector<2x256xf32>
    %84 = math.tanh %78 : vector<2x256xf32>
    %85 = vector.extract_strided_slice %83 {offsets = [0, 0], sizes = [2, 64], strides = [1, 1]} : vector<2x256xf32> to vector<2x64xf32>
    %86 = vector.extract_strided_slice %83 {offsets = [0, 64], sizes = [2, 64], strides = [1, 1]} : vector<2x256xf32> to vector<2x64xf32>
    %87 = vector.extract_strided_slice %84 {offsets = [0, 128], sizes = [2, 64], strides = [1, 1]} : vector<2x256xf32> to vector<2x64xf32>
    %88 = vector.extract_strided_slice %83 {offsets = [0, 192], sizes = [2, 64], strides = [1, 1]} : vector<2x256xf32> to vector<2x64xf32>
    %89 = arith.mulf %86, %69 : vector<2x64xf32>
    %90 = arith.mulf %85, %87 : vector<2x64xf32>
    %91 = arith.addf %89, %90 : vector<2x64xf32>
    %92 = math.tanh %91 : vector<2x64xf32>
    %93 = arith.mulf %88, %92 : vector<2x64xf32>
    %94 = vector.extract_strided_slice %93 {offsets = [0, 0], sizes = [2, 32], strides = [1, 1]} : vector<2x64xf32> to vector<2x32xf32>
    %c6_32 = arith.constant 6 : index
    %c0_33 = arith.constant 0 : index
    %95 = vector.load %arg8[%c6_32, %c0_33] : memref<16x64xf32, #tpu.memory_space<vmem>>, vector<2x32xf32>
    tpu.vector_store %arg8[%c6_32, %c0_33], %94 {strides = array<i32>} : memref<16x64xf32, #tpu.memory_space<vmem>>, vector<2x32xf32>,
    %96 = vector.extract_strided_slice %93 {offsets = [0, 32], sizes = [2, 32], strides = [1, 1]} : vector<2x64xf32> to vector<2x32xf32>
    %c8 = arith.constant 8 : index
    %c32_34 = arith.constant 32 : index
    %97 = vector.load %arg8[%c8, %c32_34] : memref<16x64xf32, #tpu.memory_space<vmem>>, vector<2x32xf32>
    tpu.vector_store %arg8[%c8, %c32_34], %96 {strides = array<i32>} : memref<16x64xf32, #tpu.memory_space<vmem>>, vector<2x32xf32>,
    %c8_35 = arith.constant 8 : index
    %c0_36 = arith.constant 0 : index
    %98 = vector.load %arg7[%c8_35, %c0_36] : memref<16x256xf32, #tpu.memory_space<vmem>>, vector<2x256xf32>
    %cst_37 = arith.constant dense<0.000000e+00> : vector<2x256xf32>
    %99 = tpu.matmul %93, %7, %cst_37 {dimension_numbers = #tpu.dot_dimension_numbers<[1], [0], [0], [1], [0, 0, 1, 1], [], []>} : vector<2x64xf32>, vector<64x256xf32>, vector<2x256xf32> -> vector<2x256xf32>
    %100 = arith.addf %98, %99 : vector<2x256xf32>
    %101 = arith.negf %100 : vector<2x256xf32>
    %102 = math.exp %101 : vector<2x256xf32>
    %cst_38 = arith.constant 1.000000e+00 : f32
    %103 = vector.broadcast %cst_38 : f32 to vector<2x256xf32>
    %104 = arith.addf %103, %102 : vector<2x256xf32>
    %105 = arith.divf %103, %104 : vector<2x256xf32>
    %106 = math.tanh %100 : vector<2x256xf32>
    %107 = vector.extract_strided_slice %105 {offsets = [0, 0], sizes = [2, 64], strides = [1, 1]} : vector<2x256xf32> to vector<2x64xf32>
    %108 = vector.extract_strided_slice %105 {offsets = [0, 64], sizes = [2, 64], strides = [1, 1]} : vector<2x256xf32> to vector<2x64xf32>
    %109 = vector.extract_strided_slice %106 {offsets = [0, 128], sizes = [2, 64], strides = [1, 1]} : vector<2x256xf32> to vector<2x64xf32>
    %110 = vector.extract_strided_slice %105 {offsets = [0, 192], sizes = [2, 64], strides = [1, 1]} : vector<2x256xf32> to vector<2x64xf32>
    %111 = arith.mulf %108, %91 : vector<2x64xf32>
    %112 = arith.mulf %107, %109 : vector<2x64xf32>
    %113 = arith.addf %111, %112 : vector<2x64xf32>
    %114 = math.tanh %113 : vector<2x64xf32>
    %115 = arith.mulf %110, %114 : vector<2x64xf32>
    %116 = vector.extract_strided_slice %115 {offsets = [0, 0], sizes = [2, 32], strides = [1, 1]} : vector<2x64xf32> to vector<2x32xf32>
    %c8_39 = arith.constant 8 : index
    %c0_40 = arith.constant 0 : index
    %117 = vector.load %arg8[%c8_39, %c0_40] : memref<16x64xf32, #tpu.memory_space<vmem>>, vector<2x32xf32>
    tpu.vector_store %arg8[%c8_39, %c0_40], %116 {strides = array<i32>} : memref<16x64xf32, #tpu.memory_space<vmem>>, vector<2x32xf32>,
    %118 = vector.extract_strided_slice %115 {offsets = [0, 32], sizes = [2, 32], strides = [1, 1]} : vector<2x64xf32> to vector<2x32xf32>
    %c6_41 = arith.constant 6 : index
    %c32_42 = arith.constant 32 : index
    %119 = vector.load %arg8[%c6_41, %c32_42] : memref<16x64xf32, #tpu.memory_space<vmem>>, vector<2x32xf32>
    tpu.vector_store %arg8[%c6_41, %c32_42], %118 {strides = array<i32>} : memref<16x64xf32, #tpu.memory_space<vmem>>, vector<2x32xf32>,
    %c10_43 = arith.constant 10 : index
    %c0_44 = arith.constant 0 : index
    %120 = vector.load %arg7[%c10_43, %c0_44] : memref<16x256xf32, #tpu.memory_space<vmem>>, vector<2x256xf32>
    %cst_45 = arith.constant dense<0.000000e+00> : vector<2x256xf32>
    %121 = tpu.matmul %115, %7, %cst_45 {dimension_numbers = #tpu.dot_dimension_numbers<[1], [0], [0], [1], [0, 0, 1, 1], [], []>} : vector<2x64xf32>, vector<64x256xf32>, vector<2x256xf32> -> vector<2x256xf32>
    %122 = arith.addf %120, %121 : vector<2x256xf32>
    %123 = arith.negf %122 : vector<2x256xf32>
    %124 = math.exp %123 : vector<2x256xf32>
    %cst_46 = arith.constant 1.000000e+00 : f32
    %125 = vector.broadcast %cst_46 : f32 to vector<2x256xf32>
    %126 = arith.addf %125, %124 : vector<2x256xf32>
    %127 = arith.divf %125, %126 : vector<2x256xf32>
    %128 = math.tanh %122 : vector<2x256xf32>
    %129 = vector.extract_strided_slice %127 {offsets = [0, 0], sizes = [2, 64], strides = [1, 1]} : vector<2x256xf32> to vector<2x64xf32>
    %130 = vector.extract_strided_slice %127 {offsets = [0, 64], sizes = [2, 64], strides = [1, 1]} : vector<2x256xf32> to vector<2x64xf32>
    %131 = vector.extract_strided_slice %128 {offsets = [0, 128], sizes = [2, 64], strides = [1, 1]} : vector<2x256xf32> to vector<2x64xf32>
    %132 = vector.extract_strided_slice %127 {offsets = [0, 192], sizes = [2, 64], strides = [1, 1]} : vector<2x256xf32> to vector<2x64xf32>
    %133 = arith.mulf %130, %113 : vector<2x64xf32>
    %134 = arith.mulf %129, %131 : vector<2x64xf32>
    %135 = arith.addf %133, %134 : vector<2x64xf32>
    %136 = math.tanh %135 : vector<2x64xf32>
    %137 = arith.mulf %132, %136 : vector<2x64xf32>
    %138 = vector.extract_strided_slice %137 {offsets = [0, 0], sizes = [2, 32], strides = [1, 1]} : vector<2x64xf32> to vector<2x32xf32>
    %c10_47 = arith.constant 10 : index
    %c0_48 = arith.constant 0 : index
    %139 = vector.load %arg8[%c10_47, %c0_48] : memref<16x64xf32, #tpu.memory_space<vmem>>, vector<2x32xf32>
    tpu.vector_store %arg8[%c10_47, %c0_48], %138 {strides = array<i32>} : memref<16x64xf32, #tpu.memory_space<vmem>>, vector<2x32xf32>,
    %140 = vector.extract_strided_slice %137 {offsets = [0, 32], sizes = [2, 32], strides = [1, 1]} : vector<2x64xf32> to vector<2x32xf32>
    %c4_49 = arith.constant 4 : index
    %c32_50 = arith.constant 32 : index
    %141 = vector.load %arg8[%c4_49, %c32_50] : memref<16x64xf32, #tpu.memory_space<vmem>>, vector<2x32xf32>
    tpu.vector_store %arg8[%c4_49, %c32_50], %140 {strides = array<i32>} : memref<16x64xf32, #tpu.memory_space<vmem>>, vector<2x32xf32>,
    %c12_51 = arith.constant 12 : index
    %c0_52 = arith.constant 0 : index
    %142 = vector.load %arg7[%c12_51, %c0_52] : memref<16x256xf32, #tpu.memory_space<vmem>>, vector<2x256xf32>
    %cst_53 = arith.constant dense<0.000000e+00> : vector<2x256xf32>
    %143 = tpu.matmul %137, %7, %cst_53 {dimension_numbers = #tpu.dot_dimension_numbers<[1], [0], [0], [1], [0, 0, 1, 1], [], []>} : vector<2x64xf32>, vector<64x256xf32>, vector<2x256xf32> -> vector<2x256xf32>
    %144 = arith.addf %142, %143 : vector<2x256xf32>
    %145 = arith.negf %144 : vector<2x256xf32>
    %146 = math.exp %145 : vector<2x256xf32>
    %cst_54 = arith.constant 1.000000e+00 : f32
    %147 = vector.broadcast %cst_54 : f32 to vector<2x256xf32>
    %148 = arith.addf %147, %146 : vector<2x256xf32>
    %149 = arith.divf %147, %148 : vector<2x256xf32>
    %150 = math.tanh %144 : vector<2x256xf32>
    %151 = vector.extract_strided_slice %149 {offsets = [0, 0], sizes = [2, 64], strides = [1, 1]} : vector<2x256xf32> to vector<2x64xf32>
    %152 = vector.extract_strided_slice %149 {offsets = [0, 64], sizes = [2, 64], strides = [1, 1]} : vector<2x256xf32> to vector<2x64xf32>
    %153 = vector.extract_strided_slice %150 {offsets = [0, 128], sizes = [2, 64], strides = [1, 1]} : vector<2x256xf32> to vector<2x64xf32>
    %154 = vector.extract_strided_slice %149 {offsets = [0, 192], sizes = [2, 64], strides = [1, 1]} : vector<2x256xf32> to vector<2x64xf32>
    %155 = arith.mulf %152, %135 : vector<2x64xf32>
    %156 = arith.mulf %151, %153 : vector<2x64xf32>
    %157 = arith.addf %155, %156 : vector<2x64xf32>
    %158 = math.tanh %157 : vector<2x64xf32>
    %159 = arith.mulf %154, %158 : vector<2x64xf32>
    %160 = vector.extract_strided_slice %159 {offsets = [0, 0], sizes = [2, 32], strides = [1, 1]} : vector<2x64xf32> to vector<2x32xf32>
    %c12_55 = arith.constant 12 : index
    %c0_56 = arith.constant 0 : index
    %161 = vector.load %arg8[%c12_55, %c0_56] : memref<16x64xf32, #tpu.memory_space<vmem>>, vector<2x32xf32>
    tpu.vector_store %arg8[%c12_55, %c0_56], %160 {strides = array<i32>} : memref<16x64xf32, #tpu.memory_space<vmem>>, vector<2x32xf32>,
    %162 = vector.extract_strided_slice %159 {offsets = [0, 32], sizes = [2, 32], strides = [1, 1]} : vector<2x64xf32> to vector<2x32xf32>
    %c2_57 = arith.constant 2 : index
    %c32_58 = arith.constant 32 : index
    %163 = vector.load %arg8[%c2_57, %c32_58] : memref<16x64xf32, #tpu.memory_space<vmem>>, vector<2x32xf32>
    tpu.vector_store %arg8[%c2_57, %c32_58], %162 {strides = array<i32>} : memref<16x64xf32, #tpu.memory_space<vmem>>, vector<2x32xf32>,
    %c14_59 = arith.constant 14 : index
    %c0_60 = arith.constant 0 : index
    %164 = vector.load %arg7[%c14_59, %c0_60] : memref<16x256xf32, #tpu.memory_space<vmem>>, vector<2x256xf32>
    %cst_61 = arith.constant dense<0.000000e+00> : vector<2x256xf32>
    %165 = tpu.matmul %159, %7, %cst_61 {dimension_numbers = #tpu.dot_dimension_numbers<[1], [0], [0], [1], [0, 0, 1, 1], [], []>} : vector<2x64xf32>, vector<64x256xf32>, vector<2x256xf32> -> vector<2x256xf32>
    %166 = arith.addf %164, %165 : vector<2x256xf32>
    %167 = arith.negf %166 : vector<2x256xf32>
    %168 = math.exp %167 : vector<2x256xf32>
    %cst_62 = arith.constant 1.000000e+00 : f32
    %169 = vector.broadcast %cst_62 : f32 to vector<2x256xf32>
    %170 = arith.addf %169, %168 : vector<2x256xf32>
    %171 = arith.divf %169, %170 : vector<2x256xf32>
    %172 = math.tanh %166 : vector<2x256xf32>
    %173 = vector.extract_strided_slice %171 {offsets = [0, 0], sizes = [2, 64], strides = [1, 1]} : vector<2x256xf32> to vector<2x64xf32>
    %174 = vector.extract_strided_slice %171 {offsets = [0, 64], sizes = [2, 64], strides = [1, 1]} : vector<2x256xf32> to vector<2x64xf32>
    %175 = vector.extract_strided_slice %172 {offsets = [0, 128], sizes = [2, 64], strides = [1, 1]} : vector<2x256xf32> to vector<2x64xf32>
    %176 = vector.extract_strided_slice %171 {offsets = [0, 192], sizes = [2, 64], strides = [1, 1]} : vector<2x256xf32> to vector<2x64xf32>
    %177 = arith.mulf %174, %157 : vector<2x64xf32>
    %178 = arith.mulf %173, %175 : vector<2x64xf32>
    %179 = arith.addf %177, %178 : vector<2x64xf32>
    %180 = math.tanh %179 : vector<2x64xf32>
    %181 = arith.mulf %176, %180 : vector<2x64xf32>
    %182 = vector.extract_strided_slice %181 {offsets = [0, 0], sizes = [2, 32], strides = [1, 1]} : vector<2x64xf32> to vector<2x32xf32>
    %c14_63 = arith.constant 14 : index
    %c0_64 = arith.constant 0 : index
    %183 = vector.load %arg8[%c14_63, %c0_64] : memref<16x64xf32, #tpu.memory_space<vmem>>, vector<2x32xf32>
    tpu.vector_store %arg8[%c14_63, %c0_64], %182 {strides = array<i32>} : memref<16x64xf32, #tpu.memory_space<vmem>>, vector<2x32xf32>,
    %184 = vector.extract_strided_slice %181 {offsets = [0, 32], sizes = [2, 32], strides = [1, 1]} : vector<2x64xf32> to vector<2x32xf32>
    %c0_65 = arith.constant 0 : index
    %c32_66 = arith.constant 32 : index
    %185 = vector.load %arg8[%c0_65, %c32_66] : memref<16x64xf32, #tpu.memory_space<vmem>>, vector<2x32xf32>
    tpu.vector_store %arg8[%c0_65, %c32_66], %184 {strides = array<i32>} : memref<16x64xf32, #tpu.memory_space<vmem>>, vector<2x32xf32>,
    %c0_67 = arith.constant 0 : index
    %c0_68 = arith.constant 0 : index
    %186 = vector.load %arg8[%c0_67, %c0_68] : memref<16x64xf32, #tpu.memory_space<vmem>>, vector<16x64xf32>
    %c0_69 = arith.constant 0 : index
    %c0_70 = arith.constant 0 : index
    %187 = vector.load %arg4[%c0_69, %c0_70] : memref<64x128xf32, #tpu.memory_space<vmem>>, vector<64x128xf32>
    %cst_71 = arith.constant dense<0.000000e+00> : vector<16x128xf32>
    %188 = tpu.matmul %186, %187, %cst_71 {dimension_numbers = #tpu.dot_dimension_numbers<[1], [0], [0], [1], [0, 0, 1, 1], [], []>} : vector<16x64xf32>, vector<64x128xf32>, vector<16x128xf32> -> vector<16x128xf32>
    %c0_72 = arith.constant 0 : index
    %c0_73 = arith.constant 0 : index
    %189 = vector.load %arg5[%c0_72, %c0_73] : memref<1x128xf32, #tpu.memory_space<vmem>>, vector<1x128xf32>
    %190 = vector.broadcast %189 : vector<1x128xf32> to vector<16x128xf32>
    %191 = arith.addf %188, %190 : vector<16x128xf32>
    %c0_74 = arith.constant 0 : index
    %c0_75 = arith.constant 0 : index
    %192 = vector.load %arg6[%c0_74, %c0_75] : memref<16x128xf32, #tpu.memory_space<vmem>>, vector<16x128xf32>
    tpu.vector_store %arg6[%c0_74, %c0_75], %191 {strides = array<i32>} : memref<16x128xf32, #tpu.memory_space<vmem>>, vector<16x128xf32>,
    return
  }
}

</mosaic_0001>

<llo_original>
// kernel: tpu_custom_call.1
$region0: #{tpu_custom_call.1}
  #allocation0 [shape = 'u32[]', space=smem, size = 0x4, offset = 0x4, fixed_abs, tag = 'smem constant byte address 0x4 - core index']
  #allocation1 [shape = 'u32[144,128]{1,0:T(1,128)}', space=vmem, size = 0x12000, scoped, tag = 'internal scratch']
  #allocation2 [shape = 'f32[16,256]{1,0:T(8,128)}', space=vmem, size = 0x4000, scoped, tag = 'scratch operand']
  #allocation3 [shape = 'f32[16,64]{1,0:T(8,128)}', space=vmem, size = 0x2000, scoped, tag = 'scratch operand']
  %s0 = inlined_call_operand.hbm [shape: f32[16,32], index: 0, kind: input, shape index: {}]
  %s1 = inlined_call_operand.hbm [shape: f32[32,256], index: 1, kind: input, shape index: {}]
  %s2 = inlined_call_operand.hbm [shape: f32[64,256], index: 2, kind: input, shape index: {}]
  %s3 = inlined_call_operand.vmem [shape: f32[1,256], index: 3, kind: input, shape index: {}]
  %s4 = inlined_call_operand.hbm [shape: f32[64,128], index: 4, kind: input, shape index: {}]
  %s5 = inlined_call_operand.vmem [shape: f32[1,128], index: 5, kind: input, shape index: {}]
  %s6 = inlined_call_operand.hbm [shape: f32[16,128], index: 6, kind: output, shape index: {}]
  %s7 = sld [smem:[#allocation0]]
  $region50: #{tpu_custom_call.1} parent=0
    _
  %s9 = ssub.s32 1, %s7
  %s10 = scalar_select 0, %s9, %s7
  $region1: #{tpu_custom_call.1} parent=0
    #allocation4 [shape = 'u8[8192]{0}', space=vmem, size = 0x2000, scoped, tag = 'input window, operand 0, single buffered']
    #allocation5 [shape = 's32[1]{0}', space=sflag, size = 0x4, scoped, tag = 'scoped memory for tpu_custom_call.1']
    #allocation6 [shape = 's32[1]{0}', space=sflag, size = 0x4, scoped, tag = 'scoped memory for tpu_custom_call.1']
    #allocation7 [shape = 'u8[32768]{0}', space=vmem, size = 0x8000, scoped, tag = 'input window, operand 1, single buffered']
    #allocation8 [shape = 's32[1]{0}', space=sflag, size = 0x4, scoped, tag = 'scoped memory for tpu_custom_call.1']
    #allocation9 [shape = 'u8[65536]{0}', space=vmem, size = 0x10000, scoped, tag = 'input window, operand 2, single buffered']
    #allocation10 [shape = 'u8[32768]{0}', space=vmem, size = 0x8000, scoped, tag = 'input window, operand 4, single buffered']
    #allocation11 [shape = 's32[1]{0}', space=sflag, size = 0x4, scoped, tag = 'scoped memory for tpu_custom_call.1']
    #allocation12 [shape = 'u8[8192]{0}', space=vmem, size = 0x2000, scoped, tag = 'output window, operand 0, single buffered']
    %11 = vsyncpa [#allocation5], 0
    %12 = vsyncpa [#allocation8], 0
    %13 = vsyncpa [#allocation11], 0
    %14 = vsyncpa [#allocation6], 0
    // Predicated region
    $region2: #{tpu_custom_call.1} parent=1 // pred_check
      _
    $region3: #{tpu_custom_call.1} parent=1 // pred_check_branch
      %16 = sbr.rel (0) target = $region5
    $region4: #{tpu_custom_call.1} parent=1 // pred_region
      %s18 = ssub.s32 256, 256
      %19 = vsyncadd [#allocation5], %s18
      %s20 = sshll.u32 [#allocation4], 4
      %s21 = int_to_ptr.vmem [resolvable:$true] %s20
      %26 = dma.hbm_to_vmem [thread:$0]  %s0, 256, %s21, [#allocation5], 128, 128, 8
    $region5: #{tpu_custom_call.1} parent=1 // pred_fallthru
      _
    // Predicated region
    $region6: #{tpu_custom_call.1} parent=1 // pred_check
      _
    $region7: #{tpu_custom_call.1} parent=1 // pred_check_branch
      %28 = sbr.rel (0) target = $region9
    $region8: #{tpu_custom_call.1} parent=1 // pred_region
      %s30 = ssub.s32 1024, 1024
      %31 = vsyncadd [#allocation8], %s30
      %s32 = sshll.u32 [#allocation7], 4
      %s33 = int_to_ptr.vmem [resolvable:$true] %s32
      %38 = dma.hbm_to_vmem [thread:$0]  %s1, 1024, %s33, [#allocation8], 256, 256, 16
    $region9: #{tpu_custom_call.1} parent=1 // pred_fallthru
      _
    // Predicated region
    $region10: #{tpu_custom_call.1} parent=1 // pred_check
      _
    $region11: #{tpu_custom_call.1} parent=1 // pred_check_branch
      %40 = sbr.rel (0) target = $region13
    $region12: #{tpu_custom_call.1} parent=1 // pred_region
      %s42 = ssub.s32 2048, 2048
      %43 = vsyncadd [#allocation8], %s42
      %s44 = sshll.u32 [#allocation9], 4
      %s45 = int_to_ptr.vmem [resolvable:$true] %s44
      %50 = dma.hbm_to_vmem [thread:$0]  %s2, 2048, %s45, [#allocation8], 256, 256, 16
    $region13: #{tpu_custom_call.1} parent=1 // pred_fallthru
      _
    // Predicated region
    $region14: #{tpu_custom_call.1} parent=1 // pred_check
      _
    $region15: #{tpu_custom_call.1} parent=1 // pred_check_branch
      %52 = sbr.rel (0) target = $region17
    $region16: #{tpu_custom_call.1} parent=1 // pred_region
      _
    $region17: #{tpu_custom_call.1} parent=1 // pred_fallthru
      _
    // Predicated region
    $region18: #{tpu_custom_call.1} parent=1 // pred_check
      _
    $region19: #{tpu_custom_call.1} parent=1 // pred_check_branch
      %54 = sbr.rel (0) target = $region21
    $region20: #{tpu_custom_call.1} parent=1 // pred_region
      %s56 = ssub.s32 1024, 1024
      %57 = vsyncadd [#allocation11], %s56
      %s58 = sshll.u32 [#allocation10], 4
      %s59 = int_to_ptr.vmem [resolvable:$true] %s58
      %64 = dma.hbm_to_vmem [thread:$0]  %s4, 1024, %s59, [#allocation11], 128, 128, 8
    $region21: #{tpu_custom_call.1} parent=1 // pred_fallthru
      _
    // Predicated region
    $region22: #{tpu_custom_call.1} parent=1 // pred_check
      _
    $region23: #{tpu_custom_call.1} parent=1 // pred_check_branch
      %66 = sbr.rel (0) target = $region25
    $region24: #{tpu_custom_call.1} parent=1 // pred_region
      _
    $region25: #{tpu_custom_call.1} parent=1 // pred_fallthru
      _
    // Predicated region
    $region26: #{tpu_custom_call.1} parent=1 // pred_check
      _
    $region27: #{tpu_custom_call.1} parent=1 // pred_check_branch
      %68 = sbr.rel (0) target = $region29
    $region28: #{tpu_custom_call.1} parent=1 // pred_region
      %69 = dma.done [#allocation5], 256
    $region29: #{tpu_custom_call.1} parent=1 // pred_fallthru
      _
    // Predicated region
    $region30: #{tpu_custom_call.1} parent=1 // pred_check
      _
    $region31: #{tpu_custom_call.1} parent=1 // pred_check_branch
      %71 = sbr.rel (0) target = $region33
    $region32: #{tpu_custom_call.1} parent=1 // pred_region
      %72 = dma.done [#allocation8], 1024
    $region33: #{tpu_custom_call.1} parent=1 // pred_fallthru
      _
    // Predicated region
    $region34: #{tpu_custom_call.1} parent=1 // pred_check
      _
    $region35: #{tpu_custom_call.1} parent=1 // pred_check_branch
      %74 = sbr.rel (0) target = $region37
    $region36: #{tpu_custom_call.1} parent=1 // pred_region
      %75 = dma.done [#allocation8], 2048
    $region37: #{tpu_custom_call.1} parent=1 // pred_fallthru
      _
    // Predicated region
    $region38: #{tpu_custom_call.1} parent=1 // pred_check
      _
    $region39: #{tpu_custom_call.1} parent=1 // pred_check_branch
      %77 = sbr.rel (0) target = $region41
    $region40: #{tpu_custom_call.1} parent=1 // pred_region
      %78 = dma.done [#allocation11], 1024
    $region41: #{tpu_custom_call.1} parent=1 // pred_fallthru
      _
    %v79 = vld [vmem:[#allocation4] sm:$0xff]
    %v80 = vld [vmem:[#allocation4 + $0x8] sm:$0xff]
    %v81 = vld [vmem:[#allocation7] sm:$0xff]
    %v82 = vld [vmem:[#allocation7 + $0x8] sm:$0xff]
    %v83 = vld [vmem:[#allocation7 + $0x10] sm:$0xff]
    %v84 = vld [vmem:[#allocation7 + $0x18] sm:$0xff]
    %v85 = vld [vmem:[#allocation7 + $0x20] sm:$0xff]
    %v86 = vld [vmem:[#allocation7 + $0x28] sm:$0xff]
    %v87 = vld [vmem:[#allocation7 + $0x30] sm:$0xff]
    %v88 = vld [vmem:[#allocation7 + $0x38] sm:$0xff]
    %v89 = vld [vmem:[%s3] sm:$0x3]
    %v91 = vlaneseq
    %v92 = vshrl.u32 %v91, 7
    %v93 = vsub.s32 0, %v92
    %v94 = vrot.slane %v89, %v93
    %v95 = vlaneseq
    %v96 = vshrl.u32 %v95, 7
    %v97 = vsub.s32 1, %v96
    %v98 = vrot.slane %v89, %v97
    %vm101 = vcmask 261120
    %v103 = vsel %vm101, %v79, 0
    %v106 = vsel %vm101, %v80, 0
    %108 = vmatprep.subr.mxu0 %v82
    %109 = vmatpush1.msra.mxu0 %v81
    %110 = vmatprep.subr.mxu0 %v84
    %111 = vmatpush1.msra.mxu0 %v83
    %112 = vmatprep.subr.mxu0 %v86
    %113 = vmatpush1.msra.mxu0 %v85
    %114 = vmatprep.subr.mxu0 %v88
    %115 = vmatpush1.msra.mxu0 %v87
    %116 = vmatprep.subr.mxu0 0.0
    %117 = vmatpush1.msra.mxu0 0.0
    %118 = vmatprep.subr.mxu0 0.0
    %119 = vmatpush1.msra.mxu0 0.0
    %120 = vmatprep.subr.mxu0 0.0
    %121 = vmatpush1.msra.mxu0 0.0
    %122 = vmatprep.subr.mxu0 0.0
    %123 = vmatpush1.msra.mxu0 0.0
    %124 = vmatprep.subr.mxu0 0.0
    %125 = vmatpush1.msra.mxu0 0.0
    %126 = vmatprep.subr.mxu0 0.0
    %127 = vmatpush1.msra.mxu0 0.0
    %128 = vmatprep.subr.mxu0 0.0
    %129 = vmatpush1.msra.mxu0 0.0
    %130 = vmatprep.subr.mxu0 0.0
    %131 = vmatpush1.msra.mxu0 0.0
    %132 = vmatprep.subr.mxu0 0.0
    %133 = vmatpush1.msra.mxu0 0.0
    %134 = vmatprep.subr.mxu0 0.0
    %135 = vmatpush1.msra.mxu0 0.0
    %136 = vmatprep.subr.mxu0 0.0
    %137 = vmatpush1.msra.mxu0 0.0
    %138 = vmatprep.subr.mxu0 0.0
    %139 = vmatpush1.msra.mxu0 0.0
    %140 = vmatprep.subr.mxu0 0.0
    %141 = vmatpush1.msra.mxu0 0.0
    %142 = vmatprep.subr.mxu0 0.0
    %143 = vmatpush1.msra.mxu0 0.0
    %144 = vmatprep.subr.mxu0 0.0
    %145 = vmatpush1.msra.mxu0 0.0
    %146 = vmatprep.subr.mxu0 0.0
    %147 = vmatpush1.msra.mxu0 0.0
    %148 = vmatprep.subr.mxu0 0.0
    %149 = vmatpush1.msra.mxu0 0.0
    %150 = vmatprep.subr.mxu0 0.0
    %151 = vmatpush1.msra.mxu0 0.0
    %152 = vmatprep.subr.mxu0 0.0
    %153 = vmatpush1.msra.mxu0 0.0
    %154 = vmatprep.subr.mxu0 0.0
    %155 = vmatpush1.msra.mxu0 0.0
    %156 = vmatprep.subr.mxu0 0.0
    %157 = vmatpush1.msra.mxu0 0.0
    %158 = vmatprep.subr.mxu0 0.0
    %159 = vmatpush1.msra.mxu0 0.0
    %160 = vmatprep.subr.mxu0 0.0
    %161 = vmatpush1.msra.mxu0 0.0
    %162 = vmatprep.subr.mxu0 0.0
    %163 = vmatpush1.msra.mxu0 0.0
    %164 = vmatprep.subr.mxu0 0.0
    %165 = vmatpush1.msra.mxu0 0.0
    %166 = vmatprep.subr.mxu0 0.0
    %167 = vmatpush1.msra.mxu0 0.0
    %168 = vmatprep.subr.mxu0 0.0
    %169 = vmatpush1.msra.mxu0 0.0
    %170 = vmatprep.subr.mxu0 0.0
    %171 = vmatpush1.msra.mxu0 0.0
    %172 = vmatprep.mubr.f32.mxu0 0.0
    %173 = vmatmul.mubr.f32.gmra.mrb[0].mxu0 %v103
    %v174 = vpop.f32.mrb[0].mxu0
    %v175 = vadd.f32 %v94, %v174
    %v176 = vpop.f32.mrb[0].mxu0
    %v177 = vadd.f32 %v98, %v176
    %178 = vmatprep.mubr.f32.mxu0 0.0
    %179 = vmatmul.mubr.f32.gmra.mrb[0].mxu0 %v106
    %v180 = vpop.f32.mrb[0].mxu0
    %v181 = vadd.f32 %v94, %v180
    %v182 = vpop.f32.mrb[0].mxu0
    %v183 = vadd.f32 %v98, %v182
    %184 = vdwg.mxu0
    %185 = vst [vmem:[#allocation2] sm:$0xff] %v175
    %186 = vst [vmem:[#allocation2 + $0x8] sm:$0xff] %v177
    %187 = vst [vmem:[#allocation2 + $0x10] sm:$0xff] %v181
    %188 = vst [vmem:[#allocation2 + $0x18] sm:$0xff] %v183
    %v189 = vld [vmem:[#allocation9] sm:$0xff]
    %v190 = vld [vmem:[#allocation9 + $0x8] sm:$0xff]
    %v191 = vld [vmem:[#allocation9 + $0x10] sm:$0xff]
    %v192 = vld [vmem:[#allocation9 + $0x18] sm:$0xff]
    %v193 = vld [vmem:[#allocation9 + $0x20] sm:$0xff]
    %v194 = vld [vmem:[#allocation9 + $0x28] sm:$0xff]
    %v195 = vld [vmem:[#allocation9 + $0x30] sm:$0xff]
    %v196 = vld [vmem:[#allocation9 + $0x38] sm:$0xff]
    %v197 = vld [vmem:[#allocation9 + $0x40] sm:$0xff]
    %v198 = vld [vmem:[#allocation9 + $0x48] sm:$0xff]
    %v199 = vld [vmem:[#allocation9 + $0x50] sm:$0xff]
    %v200 = vld [vmem:[#allocation9 + $0x58] sm:$0xff]
    %v201 = vld [vmem:[#allocation9 + $0x60] sm:$0xff]
    %v202 = vld [vmem:[#allocation9 + $0x68] sm:$0xff]
    %v203 = vld [vmem:[#allocation9 + $0x70] sm:$0xff]
    %v204 = vld [vmem:[#allocation9 + $0x78] sm:$0xff]
    %v205 = vld [vmem:[#allocation2] sm:$0x3]
    %v206 = vld [vmem:[#allocation2 + $0x8] sm:$0x3]
    %vm207 = vcmask 523264
    %v209 = vsel %vm207, 0.0, 0
    %211 = vmatprep.subr.mxu0 %v190
    %212 = vmatpush1.msra.mxu0 %v189
    %213 = vmatprep.subr.mxu0 %v192
    %214 = vmatpush1.msra.mxu0 %v191
    %215 = vmatprep.subr.mxu0 %v194
    %216 = vmatpush1.msra.mxu0 %v193
    %217 = vmatprep.subr.mxu0 %v196
    %218 = vmatpush1.msra.mxu0 %v195
    %219 = vmatprep.subr.mxu0 %v198
    %220 = vmatpush1.msra.mxu0 %v197
    %221 = vmatprep.subr.mxu0 %v200
    %222 = vmatpush1.msra.mxu0 %v199
    %223 = vmatprep.subr.mxu0 %v202
    %224 = vmatpush1.msra.mxu0 %v201
    %225 = vmatprep.subr.mxu0 %v204
    %226 = vmatpush1.msra.mxu0 %v203
    %227 = vmatprep.subr.mxu0 0.0
    %228 = vmatpush1.msra.mxu0 0.0
    %229 = vmatprep.subr.mxu0 0.0
    %230 = vmatpush1.msra.mxu0 0.0
    %231 = vmatprep.subr.mxu0 0.0
    %232 = vmatpush1.msra.mxu0 0.0
    %233 = vmatprep.subr.mxu0 0.0
    %234 = vmatpush1.msra.mxu0 0.0
    %235 = vmatprep.subr.mxu0 0.0
    %236 = vmatpush1.msra.mxu0 0.0
    %237 = vmatprep.subr.mxu0 0.0
    %238 = vmatpush1.msra.mxu0 0.0
    %239 = vmatprep.subr.mxu0 0.0
    %240 = vmatpush1.msra.mxu0 0.0
    %241 = vmatprep.subr.mxu0 0.0
    %242 = vmatpush1.msra.mxu0 0.0
    %243 = vmatprep.subr.mxu0 0.0
    %244 = vmatpush1.msra.mxu0 0.0
    %245 = vmatprep.subr.mxu0 0.0
    %246 = vmatpush1.msra.mxu0 0.0
    %247 = vmatprep.subr.mxu0 0.0
    %248 = vmatpush1.msra.mxu0 0.0
    %249 = vmatprep.subr.mxu0 0.0
    %250 = vmatpush1.msra.mxu0 0.0
    %251 = vmatprep.subr.mxu0 0.0
    %252 = vmatpush1.msra.mxu0 0.0
    %253 = vmatprep.subr.mxu0 0.0
    %254 = vmatpush1.msra.mxu0 0.0
    %255 = vmatprep.subr.mxu0 0.0
    %256 = vmatpush1.msra.mxu0 0.0
    %257 = vmatprep.subr.mxu0 0.0
    %258 = vmatpush1.msra.mxu0 0.0
    %259 = vmatprep.subr.mxu0 0.0
    %260 = vmatpush1.msra.mxu0 0.0
    %261 = vmatprep.subr.mxu0 0.0
    %262 = vmatpush1.msra.mxu0 0.0
    %263 = vmatprep.subr.mxu0 0.0
    %264 = vmatpush1.msra.mxu0 0.0
    %265 = vmatprep.subr.mxu0 0.0
    %266 = vmatpush1.msra.mxu0 0.0
    %267 = vmatprep.subr.mxu0 0.0
    %268 = vmatpush1.msra.mxu0 0.0
    %269 = vmatprep.subr.mxu0 0.0
    %270 = vmatpush1.msra.mxu0 0.0
    %271 = vmatprep.subr.mxu0 0.0
    %272 = vmatpush1.msra.mxu0 0.0
    %273 = vmatprep.subr.mxu0 0.0
    %274 = vmatpush1.msra.mxu0 0.0
    %275 = vmatprep.mubr.f32.mxu0 0.0
    %276 = vmatmul.mubr.f32.gmra.mrb[0].mxu0 %v209
    %v277 = vpop.f32.mrb[0].mxu0
    %v278 = vadd.f32 0.0, %v277
    %v279 = vpop.f32.mrb[0].mxu0
    %v280 = vadd.f32 0.0, %v279
    %281 = vdwg.mxu0
    %v282 = vadd.f32 %v205, %v278
    %v283 = vadd.f32 %v206, %v280
    %v284 = vxor.u32 %v282, 2147483648
    %v285 = vxor.u32 %v283, 2147483648
    %v286 = vmul.f32 %v284, 1.442695
    %v287 = vpow.pop %v286
    %v288 = vmul.f32 %v285, 1.442695
    %v289 = vpow.pop %v288
    %v290 = vadd.f32 %v287, 1.0
    %v291 = vadd.f32 %v289, 1.0
    %v292 = vrcp.pop %v290
    %v293 = vmul.f32 1.0, %v292
    %v294 = vrcp.pop %v291
    %v295 = vmul.f32 1.0, %v294
    %v296 = vtanh.pop %v283
    %v297 = vmul.f32 %v293, 0.0
    %v298 = vmul.f32 %v293, %v296
    %300 = vrot.lane.b32.xlu0 %v298, 64
    %v301 = vpop.permute.xlu0 %300
    %v303 = vadd.f32 %v297, %v301
    %v304 = vtanh.pop %v303
    %v305 = vmul.f32 %v295, %v304
    %307 = vrot.lane.b32.xlu0 %v305, 64
    %v308 = vpop.permute.xlu0 %307
    %vm310 = vcmask 254976
    %311 = vst.msk [vmem:[#allocation3] sm:$0x3] %vm310, %v308
    %vm312 = vcmask 517376
    %313 = vst.msk [vmem:[#allocation3 + $0xe] sm:$0x3] %vm312, %v308
    %v314 = vld [vmem:[#allocation2] sm:$0xc]
    %v315 = vld [vmem:[#allocation2 + $0x8] sm:$0xc]
    %v316 = vsel %vm207, %v308, 0
    %318 = vmatprep.subr.mxu0 %v190
    %319 = vmatpush1.msra.mxu0 %v189
    %320 = vmatprep.subr.mxu0 %v192
    %321 = vmatpush1.msra.mxu0 %v191
    %322 = vmatprep.subr.mxu0 %v194
    %323 = vmatpush1.msra.mxu0 %v193
    %324 = vmatprep.subr.mxu0 %v196
    %325 = vmatpush1.msra.mxu0 %v195
    %326 = vmatprep.subr.mxu0 %v198
    %327 = vmatpush1.msra.mxu0 %v197
    %328 = vmatprep.subr.mxu0 %v200
    %329 = vmatpush1.msra.mxu0 %v199
    %330 = vmatprep.subr.mxu0 %v202
    %331 = vmatpush1.msra.mxu0 %v201
    %332 = vmatprep.subr.mxu0 %v204
    %333 = vmatpush1.msra.mxu0 %v203
    %334 = vmatprep.subr.mxu0 0.0
    %335 = vmatpush1.msra.mxu0 0.0
    %336 = vmatprep.subr.mxu0 0.0
    %337 = vmatpush1.msra.mxu0 0.0
    %338 = vmatprep.subr.mxu0 0.0
    %339 = vmatpush1.msra.mxu0 0.0
    %340 = vmatprep.subr.mxu0 0.0
    %341 = vmatpush1.msra.mxu0 0.0
    %342 = vmatprep.subr.mxu0 0.0
    %343 = vmatpush1.msra.mxu0 0.0
    %344 = vmatprep.subr.mxu0 0.0
    %345 = vmatpush1.msra.mxu0 0.0
    %346 = vmatprep.subr.mxu0 0.0
    %347 = vmatpush1.msra.mxu0 0.0
    %348 = vmatprep.subr.mxu0 0.0
    %349 = vmatpush1.msra.mxu0 0.0
    %350 = vmatprep.subr.mxu0 0.0
    %351 = vmatpush1.msra.mxu0 0.0
    %352 = vmatprep.subr.mxu0 0.0
    %353 = vmatpush1.msra.mxu0 0.0
    %354 = vmatprep.subr.mxu0 0.0
    %355 = vmatpush1.msra.mxu0 0.0
    %356 = vmatprep.subr.mxu0 0.0
    %357 = vmatpush1.msra.mxu0 0.0
    %358 = vmatprep.subr.mxu0 0.0
    %359 = vmatpush1.msra.mxu0 0.0
    %360 = vmatprep.subr.mxu0 0.0
    %361 = vmatpush1.msra.mxu0 0.0
    %362 = vmatprep.subr.mxu0 0.0
    %363 = vmatpush1.msra.mxu0 0.0
    %364 = vmatprep.subr.mxu0 0.0
    %365 = vmatpush1.msra.mxu0 0.0
    %366 = vmatprep.subr.mxu0 0.0
    %367 = vmatpush1.msra.mxu0 0.0
    %368 = vmatprep.subr.mxu0 0.0
    %369 = vmatpush1.msra.mxu0 0.0
    %370 = vmatprep.subr.mxu0 0.0
    %371 = vmatpush1.msra.mxu0 0.0
    %372 = vmatprep.subr.mxu0 0.0
    %373 = vmatpush1.msra.mxu0 0.0
    %374 = vmatprep.subr.mxu0 0.0
    %375 = vmatpush1.msra.mxu0 0.0
    %376 = vmatprep.subr.mxu0 0.0
    %377 = vmatpush1.msra.mxu0 0.0
    %378 = vmatprep.subr.mxu0 0.0
    %379 = vmatpush1.msra.mxu0 0.0
    %380 = vmatprep.subr.mxu0 0.0
    %381 = vmatpush1.msra.mxu0 0.0
    %382 = vmatprep.mubr.f32.mxu0 0.0
    %383 = vmatmul.mubr.f32.gmra.mrb[0].mxu0 %v316
    %v384 = vpop.f32.mrb[0].mxu0
    %v385 = vadd.f32 0.0, %v384
    %v386 = vpop.f32.mrb[0].mxu0
    %v387 = vadd.f32 0.0, %v386
    %388 = vdwg.mxu0
    %v391 = vrot.slane %v385, 6
    %v392 = vrot.slane %v387, 6
    %v395 = vadd.f32 %v314, %v391
    %v396 = vadd.f32 %v315, %v392
    %v397 = vxor.u32 %v395, 2147483648
    %v398 = vxor.u32 %v396, 2147483648
    %v399 = vmul.f32 %v397, 1.442695
    %v400 = vpow.pop %v399
    %v401 = vmul.f32 %v398, 1.442695
    %v402 = vpow.pop %v401
    %v403 = vadd.f32 %v400, 1.0
    %v404 = vadd.f32 %v402, 1.0
    %v405 = vrcp.pop %v403
    %v406 = vmul.f32 1.0, %v405
    %v407 = vrcp.pop %v404
    %v408 = vmul.f32 1.0, %v407
    %v409 = vtanh.pop %v396
    %v411 = vrot.slane %v303, 6
    %v413 = vmul.f32 %v406, %v411
    %v414 = vmul.f32 %v406, %v409
    %416 = vrot.lane.b32.xlu0 %v414, 64
    %v417 = vpop.permute.xlu0 %416
    %v419 = vadd.f32 %v413, %v417
    %v420 = vtanh.pop %v419
    %v421 = vmul.f32 %v408, %v420
    %423 = vrot.lane.b32.xlu0 %v421, 64
    %v424 = vpop.permute.xlu0 %423
    %vm426 = vcmask 257026
    %427 = vst.msk [vmem:[#allocation3] sm:$0xc] %vm426, %v424
    %vm428 = vcmask 519426
    %429 = vst.msk [vmem:[#allocation3 + $0xa] sm:$0xc] %vm428, %v424
    %v430 = vld [vmem:[#allocation2] sm:$0x30]
    %v431 = vld [vmem:[#allocation2 + $0x8] sm:$0x30]
    %v432 = vrot.slane %v421, 2
    %433 = vrot.lane.b32.xlu0 %v432, 64
    %v434 = vpop.permute.xlu0 %433
    %v435 = vsel %vm207, %v434, 0
    %437 = vmatprep.subr.mxu0 %v190
    %438 = vmatpush1.msra.mxu0 %v189
    %439 = vmatprep.subr.mxu0 %v192
    %440 = vmatpush1.msra.mxu0 %v191
    %441 = vmatprep.subr.mxu0 %v194
    %442 = vmatpush1.msra.mxu0 %v193
    %443 = vmatprep.subr.mxu0 %v196
    %444 = vmatpush1.msra.mxu0 %v195
    %445 = vmatprep.subr.mxu0 %v198
    %446 = vmatpush1.msra.mxu0 %v197
    %447 = vmatprep.subr.mxu0 %v200
    %448 = vmatpush1.msra.mxu0 %v199
    %449 = vmatprep.subr.mxu0 %v202
    %450 = vmatpush1.msra.mxu0 %v201
    %451 = vmatprep.subr.mxu0 %v204
    %452 = vmatpush1.msra.mxu0 %v203
    %453 = vmatprep.subr.mxu0 0.0
    %454 = vmatpush1.msra.mxu0 0.0
    %455 = vmatprep.subr.mxu0 0.0
    %456 = vmatpush1.msra.mxu0 0.0
    %457 = vmatprep.subr.mxu0 0.0
    %458 = vmatpush1.msra.mxu0 0.0
    %459 = vmatprep.subr.mxu0 0.0
    %460 = vmatpush1.msra.mxu0 0.0
    %461 = vmatprep.subr.mxu0 0.0
    %462 = vmatpush1.msra.mxu0 0.0
    %463 = vmatprep.subr.mxu0 0.0
    %464 = vmatpush1.msra.mxu0 0.0
    %465 = vmatprep.subr.mxu0 0.0
    %466 = vmatpush1.msra.mxu0 0.0
    %467 = vmatprep.subr.mxu0 0.0
    %468 = vmatpush1.msra.mxu0 0.0
    %469 = vmatprep.subr.mxu0 0.0
    %470 = vmatpush1.msra.mxu0 0.0
    %471 = vmatprep.subr.mxu0 0.0
    %472 = vmatpush1.msra.mxu0 0.0
    %473 = vmatprep.subr.mxu0 0.0
    %474 = vmatpush1.msra.mxu0 0.0
    %475 = vmatprep.subr.mxu0 0.0
    %476 = vmatpush1.msra.mxu0 0.0
    %477 = vmatprep.subr.mxu0 0.0
    %478 = vmatpush1.msra.mxu0 0.0
    %479 = vmatprep.subr.mxu0 0.0
    %480 = vmatpush1.msra.mxu0 0.0
    %481 = vmatprep.subr.mxu0 0.0
    %482 = vmatpush1.msra.mxu0 0.0
    %483 = vmatprep.subr.mxu0 0.0
    %484 = vmatpush1.msra.mxu0 0.0
    %485 = vmatprep.subr.mxu0 0.0
    %486 = vmatpush1.msra.mxu0 0.0
    %487 = vmatprep.subr.mxu0 0.0
    %488 = vmatpush1.msra.mxu0 0.0
    %489 = vmatprep.subr.mxu0 0.0
    %490 = vmatpush1.msra.mxu0 0.0
    %491 = vmatprep.subr.mxu0 0.0
    %492 = vmatpush1.msra.mxu0 0.0
    %493 = vmatprep.subr.mxu0 0.0
    %494 = vmatpush1.msra.mxu0 0.0
    %495 = vmatprep.subr.mxu0 0.0
    %496 = vmatpush1.msra.mxu0 0.0
    %497 = vmatprep.subr.mxu0 0.0
    %498 = vmatpush1.msra.mxu0 0.0
    %499 = vmatprep.subr.mxu0 0.0
    %500 = vmatpush1.msra.mxu0 0.0
    %501 = vmatprep.mubr.f32.mxu0 0.0
    %502 = vmatmul.mubr.f32.gmra.mrb[0].mxu0 %v435
    %v503 = vpop.f32.mrb[0].mxu0
    %v504 = vadd.f32 0.0, %v503
    %v505 = vpop.f32.mrb[0].mxu0
    %v506 = vadd.f32 0.0, %v505
    %507 = vdwg.mxu0
    %v510 = vrot.slane %v504, 4
    %v511 = vrot.slane %v506, 4
    %v514 = vadd.f32 %v430, %v510
    %v515 = vadd.f32 %v431, %v511
    %v516 = vxor.u32 %v514, 2147483648
    %v517 = vxor.u32 %v515, 2147483648
    %v518 = vmul.f32 %v516, 1.442695
    %v519 = vpow.pop %v518
    %v520 = vmul.f32 %v517, 1.442695
    %v521 = vpow.pop %v520
    %v522 = vadd.f32 %v519, 1.0
    %v523 = vadd.f32 %v521, 1.0
    %v524 = vrcp.pop %v522
    %v525 = vmul.f32 1.0, %v524
    %v526 = vrcp.pop %v523
    %v527 = vmul.f32 1.0, %v526
    %v528 = vtanh.pop %v515
    %v530 = vrot.slane %v419, 6
    %v532 = vmul.f32 %v525, %v530
    %v533 = vmul.f32 %v525, %v528
    %535 = vrot.lane.b32.xlu0 %v533, 64
    %v536 = vpop.permute.xlu0 %535
    %v538 = vadd.f32 %v532, %v536
    %v539 = vtanh.pop %v538
    %v540 = vmul.f32 %v527, %v539
    %542 = vrot.lane.b32.xlu0 %v540, 64
    %v543 = vpop.permute.xlu0 %542
    %vm545 = vcmask 259076
    %546 = vst.msk [vmem:[#allocation3] sm:$0x30] %vm545, %v543
    %vm547 = vcmask 521476
    %548 = vst.msk [vmem:[#allocation3 + $0x6] sm:$0x30] %vm547, %v543
    %v549 = vld [vmem:[#allocation2] sm:$0xc0]
    %v550 = vld [vmem:[#allocation2 + $0x8] sm:$0xc0]
    %v551 = vrot.slane %v540, 4
    %552 = vrot.lane.b32.xlu0 %v551, 64
    %v553 = vpop.permute.xlu0 %552
    %v554 = vsel %vm207, %v553, 0
    %556 = vmatprep.subr.mxu0 %v190
    %557 = vmatpush1.msra.mxu0 %v189
    %558 = vmatprep.subr.mxu0 %v192
    %559 = vmatpush1.msra.mxu0 %v191
    %560 = vmatprep.subr.mxu0 %v194
    %561 = vmatpush1.msra.mxu0 %v193
    %562 = vmatprep.subr.mxu0 %v196
    %563 = vmatpush1.msra.mxu0 %v195
    %564 = vmatprep.subr.mxu0 %v198
    %565 = vmatpush1.msra.mxu0 %v197
    %566 = vmatprep.subr.mxu0 %v200
    %567 = vmatpush1.msra.mxu0 %v199
    %568 = vmatprep.subr.mxu0 %v202
    %569 = vmatpush1.msra.mxu0 %v201
    %570 = vmatprep.subr.mxu0 %v204
    %571 = vmatpush1.msra.mxu0 %v203
    %572 = vmatprep.subr.mxu0 0.0
    %573 = vmatpush1.msra.mxu0 0.0
    %574 = vmatprep.subr.mxu0 0.0
    %575 = vmatpush1.msra.mxu0 0.0
    %576 = vmatprep.subr.mxu0 0.0
    %577 = vmatpush1.msra.mxu0 0.0
    %578 = vmatprep.subr.mxu0 0.0
    %579 = vmatpush1.msra.mxu0 0.0
    %580 = vmatprep.subr.mxu0 0.0
    %581 = vmatpush1.msra.mxu0 0.0
    %582 = vmatprep.subr.mxu0 0.0
    %583 = vmatpush1.msra.mxu0 0.0
    %584 = vmatprep.subr.mxu0 0.0
    %585 = vmatpush1.msra.mxu0 0.0
    %586 = vmatprep.subr.mxu0 0.0
    %587 = vmatpush1.msra.mxu0 0.0
    %588 = vmatprep.subr.mxu0 0.0
    %589 = vmatpush1.msra.mxu0 0.0
    %590 = vmatprep.subr.mxu0 0.0
    %591 = vmatpush1.msra.mxu0 0.0
    %592 = vmatprep.subr.mxu0 0.0
    %593 = vmatpush1.msra.mxu0 0.0
    %594 = vmatprep.subr.mxu0 0.0
    %595 = vmatpush1.msra.mxu0 0.0
    %596 = vmatprep.subr.mxu0 0.0
    %597 = vmatpush1.msra.mxu0 0.0
    %598 = vmatprep.subr.mxu0 0.0
    %599 = vmatpush1.msra.mxu0 0.0
    %600 = vmatprep.subr.mxu0 0.0
    %601 = vmatpush1.msra.mxu0 0.0
    %602 = vmatprep.subr.mxu0 0.0
    %603 = vmatpush1.msra.mxu0 0.0
    %604 = vmatprep.subr.mxu0 0.0
    %605 = vmatpush1.msra.mxu0 0.0
    %606 = vmatprep.subr.mxu0 0.0
    %607 = vmatpush1.msra.mxu0 0.0
    %608 = vmatprep.subr.mxu0 0.0
    %609 = vmatpush1.msra.mxu0 0.0
    %610 = vmatprep.subr.mxu0 0.0
    %611 = vmatpush1.msra.mxu0 0.0
    %612 = vmatprep.subr.mxu0 0.0
    %613 = vmatpush1.msra.mxu0 0.0
    %614 = vmatprep.subr.mxu0 0.0
    %615 = vmatpush1.msra.mxu0 0.0
    %616 = vmatprep.subr.mxu0 0.0
    %617 = vmatpush1.msra.mxu0 0.0
    %618 = vmatprep.subr.mxu0 0.0
    %619 = vmatpush1.msra.mxu0 0.0
    %620 = vmatprep.mubr.f32.mxu0 0.0
    %621 = vmatmul.mubr.f32.gmra.mrb[0].mxu0 %v554
    %v622 = vpop.f32.mrb[0].mxu0
    %v623 = vadd.f32 0.0, %v622
    %v624 = vpop.f32.mrb[0].mxu0
    %v625 = vadd.f32 0.0, %v624
    %626 = vdwg.mxu0
    %v629 = vrot.slane %v623, 2
    %v630 = vrot.slane %v625, 2
    %v633 = vadd.f32 %v549, %v629
    %v634 = vadd.f32 %v550, %v630
    %v635 = vxor.u32 %v633, 2147483648
    %v636 = vxor.u32 %v634, 2147483648
    %v637 = vmul.f32 %v635, 1.442695
    %v638 = vpow.pop %v637
    %v639 = vmul.f32 %v636, 1.442695
    %v640 = vpow.pop %v639
    %v641 = vadd.f32 %v638, 1.0
    %v642 = vadd.f32 %v640, 1.0
    %v643 = vrcp.pop %v641
    %v644 = vmul.f32 1.0, %v643
    %v645 = vrcp.pop %v642
    %v646 = vmul.f32 1.0, %v645
    %v647 = vtanh.pop %v634
    %v649 = vrot.slane %v538, 6
    %v651 = vmul.f32 %v644, %v649
    %v652 = vmul.f32 %v644, %v647
    %654 = vrot.lane.b32.xlu0 %v652, 64
    %v655 = vpop.permute.xlu0 %654
    %v657 = vadd.f32 %v651, %v655
    %v658 = vtanh.pop %v657
    %v659 = vmul.f32 %v646, %v658
    %661 = vrot.lane.b32.xlu0 %v659, 64
    %v662 = vpop.permute.xlu0 %661
    %vm664 = vcmask 261126
    %665 = vst.msk [vmem:[#allocation3] sm:$0xc0] %vm664, %v662
    %vm666 = vcmask 523526
    %667 = vst.msk [vmem:[#allocation3 + $0x2] sm:$0xc0] %vm666, %v662
    %v668 = vld [vmem:[#allocation2 + $0x10] sm:$0x3]
    %v669 = vld [vmem:[#allocation2 + $0x18] sm:$0x3]
    %v670 = vrot.slane %v659, 6
    %671 = vrot.lane.b32.xlu0 %v670, 64
    %v672 = vpop.permute.xlu0 %671
    %v673 = vsel %vm207, %v672, 0
    %675 = vmatprep.subr.mxu0 %v190
    %676 = vmatpush1.msra.mxu0 %v189
    %677 = vmatprep.subr.mxu0 %v192
    %678 = vmatpush1.msra.mxu0 %v191
    %679 = vmatprep.subr.mxu0 %v194
    %680 = vmatpush1.msra.mxu0 %v193
    %681 = vmatprep.subr.mxu0 %v196
    %682 = vmatpush1.msra.mxu0 %v195
    %683 = vmatprep.subr.mxu0 %v198
    %684 = vmatpush1.msra.mxu0 %v197
    %685 = vmatprep.subr.mxu0 %v200
    %686 = vmatpush1.msra.mxu0 %v199
    %687 = vmatprep.subr.mxu0 %v202
    %688 = vmatpush1.msra.mxu0 %v201
    %689 = vmatprep.subr.mxu0 %v204
    %690 = vmatpush1.msra.mxu0 %v203
    %691 = vmatprep.subr.mxu0 0.0
    %692 = vmatpush1.msra.mxu0 0.0
    %693 = vmatprep.subr.mxu0 0.0
    %694 = vmatpush1.msra.mxu0 0.0
    %695 = vmatprep.subr.mxu0 0.0
    %696 = vmatpush1.msra.mxu0 0.0
    %697 = vmatprep.subr.mxu0 0.0
    %698 = vmatpush1.msra.mxu0 0.0
    %699 = vmatprep.subr.mxu0 0.0
    %700 = vmatpush1.msra.mxu0 0.0
    %701 = vmatprep.subr.mxu0 0.0
    %702 = vmatpush1.msra.mxu0 0.0
    %703 = vmatprep.subr.mxu0 0.0
    %704 = vmatpush1.msra.mxu0 0.0
    %705 = vmatprep.subr.mxu0 0.0
    %706 = vmatpush1.msra.mxu0 0.0
    %707 = vmatprep.subr.mxu0 0.0
    %708 = vmatpush1.msra.mxu0 0.0
    %709 = vmatprep.subr.mxu0 0.0
    %710 = vmatpush1.msra.mxu0 0.0
    %711 = vmatprep.subr.mxu0 0.0
    %712 = vmatpush1.msra.mxu0 0.0
    %713 = vmatprep.subr.mxu0 0.0
    %714 = vmatpush1.msra.mxu0 0.0
    %715 = vmatprep.subr.mxu0 0.0
    %716 = vmatpush1.msra.mxu0 0.0
    %717 = vmatprep.subr.mxu0 0.0
    %718 = vmatpush1.msra.mxu0 0.0
    %719 = vmatprep.subr.mxu0 0.0
    %720 = vmatpush1.msra.mxu0 0.0
    %721 = vmatprep.subr.mxu0 0.0
    %722 = vmatpush1.msra.mxu0 0.0
    %723 = vmatprep.subr.mxu0 0.0
    %724 = vmatpush1.msra.mxu0 0.0
    %725 = vmatprep.subr.mxu0 0.0
    %726 = vmatpush1.msra.mxu0 0.0
    %727 = vmatprep.subr.mxu0 0.0
    %728 = vmatpush1.msra.mxu0 0.0
    %729 = vmatprep.subr.mxu0 0.0
    %730 = vmatpush1.msra.mxu0 0.0
    %731 = vmatprep.subr.mxu0 0.0
    %732 = vmatpush1.msra.mxu0 0.0
    %733 = vmatprep.subr.mxu0 0.0
    %734 = vmatpush1.msra.mxu0 0.0
    %735 = vmatprep.subr.mxu0 0.0
    %736 = vmatpush1.msra.mxu0 0.0
    %737 = vmatprep.subr.mxu0 0.0
    %738 = vmatpush1.msra.mxu0 0.0
    %739 = vmatprep.mubr.f32.mxu0 0.0
    %740 = vmatmul.mubr.f32.gmra.mrb[0].mxu0 %v673
    %v741 = vpop.f32.mrb[0].mxu0
    %v742 = vadd.f32 0.0, %v741
    %v743 = vpop.f32.mrb[0].mxu0
    %v744 = vadd.f32 0.0, %v743
    %745 = vdwg.mxu0
    %v746 = vadd.f32 %v668, %v742
    %v747 = vadd.f32 %v669, %v744
    %v748 = vxor.u32 %v746, 2147483648
    %v749 = vxor.u32 %v747, 2147483648
    %v750 = vmul.f32 %v748, 1.442695
    %v751 = vpow.pop %v750
    %v752 = vmul.f32 %v749, 1.442695
    %v753 = vpow.pop %v752
    %v754 = vadd.f32 %v751, 1.0
    %v755 = vadd.f32 %v753, 1.0
    %v756 = vrcp.pop %v754
    %v757 = vmul.f32 1.0, %v756
    %v758 = vrcp.pop %v755
    %v759 = vmul.f32 1.0, %v758
    %v760 = vtanh.pop %v747
    %v762 = vrot.slane %v657, 6
    %v764 = vmul.f32 %v757, %v762
    %v765 = vmul.f32 %v757, %v760
    %767 = vrot.lane.b32.xlu0 %v765, 64
    %v768 = vpop.permute.xlu0 %767
    %v770 = vadd.f32 %v764, %v768
    %v771 = vtanh.pop %v770
    %v772 = vmul.f32 %v759, %v771
    %774 = vrot.lane.b32.xlu0 %v772, 64
    %v775 = vpop.permute.xlu0 %774
    %777 = vst.msk [vmem:[#allocation3 + $0x8] sm:$0x3] %vm310, %v775
    %778 = vst.msk [vmem:[#allocation3 + $0x6] sm:$0x3] %vm312, %v775
    %v779 = vld [vmem:[#allocation2 + $0x10] sm:$0xc]
    %v780 = vld [vmem:[#allocation2 + $0x18] sm:$0xc]
    %v781 = vsel %vm207, %v775, 0
    %783 = vmatprep.subr.mxu0 %v190
    %784 = vmatpush1.msra.mxu0 %v189
    %785 = vmatprep.subr.mxu0 %v192
    %786 = vmatpush1.msra.mxu0 %v191
    %787 = vmatprep.subr.mxu0 %v194
    %788 = vmatpush1.msra.mxu0 %v193
    %789 = vmatprep.subr.mxu0 %v196
    %790 = vmatpush1.msra.mxu0 %v195
    %791 = vmatprep.subr.mxu0 %v198
    %792 = vmatpush1.msra.mxu0 %v197
    %793 = vmatprep.subr.mxu0 %v200
    %794 = vmatpush1.msra.mxu0 %v199
    %795 = vmatprep.subr.mxu0 %v202
    %796 = vmatpush1.msra.mxu0 %v201
    %797 = vmatprep.subr.mxu0 %v204
    %798 = vmatpush1.msra.mxu0 %v203
    %799 = vmatprep.subr.mxu0 0.0
    %800 = vmatpush1.msra.mxu0 0.0
    %801 = vmatprep.subr.mxu0 0.0
    %802 = vmatpush1.msra.mxu0 0.0
    %803 = vmatprep.subr.mxu0 0.0
    %804 = vmatpush1.msra.mxu0 0.0
    %805 = vmatprep.subr.mxu0 0.0
    %806 = vmatpush1.msra.mxu0 0.0
    %807 = vmatprep.subr.mxu0 0.0
    %808 = vmatpush1.msra.mxu0 0.0
    %809 = vmatprep.subr.mxu0 0.0
    %810 = vmatpush1.msra.mxu0 0.0
    %811 = vmatprep.subr.mxu0 0.0
    %812 = vmatpush1.msra.mxu0 0.0
    %813 = vmatprep.subr.mxu0 0.0
    %814 = vmatpush1.msra.mxu0 0.0
    %815 = vmatprep.subr.mxu0 0.0
    %816 = vmatpush1.msra.mxu0 0.0
    %817 = vmatprep.subr.mxu0 0.0
    %818 = vmatpush1.msra.mxu0 0.0
    %819 = vmatprep.subr.mxu0 0.0
    %820 = vmatpush1.msra.mxu0 0.0
    %821 = vmatprep.subr.mxu0 0.0
    %822 = vmatpush1.msra.mxu0 0.0
    %823 = vmatprep.subr.mxu0 0.0
    %824 = vmatpush1.msra.mxu0 0.0
    %825 = vmatprep.subr.mxu0 0.0
    %826 = vmatpush1.msra.mxu0 0.0
    %827 = vmatprep.subr.mxu0 0.0
    %828 = vmatpush1.msra.mxu0 0.0
    %829 = vmatprep.subr.mxu0 0.0
    %830 = vmatpush1.msra.mxu0 0.0
    %831 = vmatprep.subr.mxu0 0.0
    %832 = vmatpush1.msra.mxu0 0.0
    %833 = vmatprep.subr.mxu0 0.0
    %834 = vmatpush1.msra.mxu0 0.0
    %835 = vmatprep.subr.mxu0 0.0
    %836 = vmatpush1.msra.mxu0 0.0
    %837 = vmatprep.subr.mxu0 0.0
    %838 = vmatpush1.msra.mxu0 0.0
    %839 = vmatprep.subr.mxu0 0.0
    %840 = vmatpush1.msra.mxu0 0.0
    %841 = vmatprep.subr.mxu0 0.0
    %842 = vmatpush1.msra.mxu0 0.0
    %843 = vmatprep.subr.mxu0 0.0
    %844 = vmatpush1.msra.mxu0 0.0
    %845 = vmatprep.subr.mxu0 0.0
    %846 = vmatpush1.msra.mxu0 0.0
    %847 = vmatprep.mubr.f32.mxu0 0.0
    %848 = vmatmul.mubr.f32.gmra.mrb[0].mxu0 %v781
    %v849 = vpop.f32.mrb[0].mxu0
    %v850 = vadd.f32 0.0, %v849
    %v851 = vpop.f32.mrb[0].mxu0
    %v852 = vadd.f32 0.0, %v851
    %853 = vdwg.mxu0
    %v856 = vrot.slane %v850, 6
    %v857 = vrot.slane %v852, 6
    %v860 = vadd.f32 %v779, %v856
    %v861 = vadd.f32 %v780, %v857
    %v862 = vxor.u32 %v860, 2147483648
    %v863 = vxor.u32 %v861, 2147483648
    %v864 = vmul.f32 %v862, 1.442695
    %v865 = vpow.pop %v864
    %v866 = vmul.f32 %v863, 1.442695
    %v867 = vpow.pop %v866
    %v868 = vadd.f32 %v865, 1.0
    %v869 = vadd.f32 %v867, 1.0
    %v870 = vrcp.pop %v868
    %v871 = vmul.f32 1.0, %v870
    %v872 = vrcp.pop %v869
    %v873 = vmul.f32 1.0, %v872
    %v874 = vtanh.pop %v861
    %v876 = vrot.slane %v770, 6
    %v878 = vmul.f32 %v871, %v876
    %v879 = vmul.f32 %v871, %v874
    %881 = vrot.lane.b32.xlu0 %v879, 64
    %v882 = vpop.permute.xlu0 %881
    %v884 = vadd.f32 %v878, %v882
    %v885 = vtanh.pop %v884
    %v886 = vmul.f32 %v873, %v885
    %888 = vrot.lane.b32.xlu0 %v886, 64
    %v889 = vpop.permute.xlu0 %888
    %891 = vst.msk [vmem:[#allocation3 + $0x8] sm:$0xc] %vm426, %v889
    %892 = vst.msk [vmem:[#allocation3 + $0x2] sm:$0xc] %vm428, %v889
    %v893 = vld [vmem:[#allocation2 + $0x10] sm:$0x30]
    %v894 = vld [vmem:[#allocation2 + $0x18] sm:$0x30]
    %v895 = vrot.slane %v886, 2
    %896 = vrot.lane.b32.xlu0 %v895, 64
    %v897 = vpop.permute.xlu0 %896
    %v898 = vsel %vm207, %v897, 0
    %900 = vmatprep.subr.mxu0 %v190
    %901 = vmatpush1.msra.mxu0 %v189
    %902 = vmatprep.subr.mxu0 %v192
    %903 = vmatpush1.msra.mxu0 %v191
    %904 = vmatprep.subr.mxu0 %v194
    %905 = vmatpush1.msra.mxu0 %v193
    %906 = vmatprep.subr.mxu0 %v196
    %907 = vmatpush1.msra.mxu0 %v195
    %908 = vmatprep.subr.mxu0 %v198
    %909 = vmatpush1.msra.mxu0 %v197
    %910 = vmatprep.subr.mxu0 %v200
    %911 = vmatpush1.msra.mxu0 %v199
    %912 = vmatprep.subr.mxu0 %v202
    %913 = vmatpush1.msra.mxu0 %v201
    %914 = vmatprep.subr.mxu0 %v204
    %915 = vmatpush1.msra.mxu0 %v203
    %916 = vmatprep.subr.mxu0 0.0
    %917 = vmatpush1.msra.mxu0 0.0
    %918 = vmatprep.subr.mxu0 0.0
    %919 = vmatpush1.msra.mxu0 0.0
    %920 = vmatprep.subr.mxu0 0.0
    %921 = vmatpush1.msra.mxu0 0.0
    %922 = vmatprep.subr.mxu0 0.0
    %923 = vmatpush1.msra.mxu0 0.0
    %924 = vmatprep.subr.mxu0 0.0
    %925 = vmatpush1.msra.mxu0 0.0
    %926 = vmatprep.subr.mxu0 0.0
    %927 = vmatpush1.msra.mxu0 0.0
    %928 = vmatprep.subr.mxu0 0.0
    %929 = vmatpush1.msra.mxu0 0.0
    %930 = vmatprep.subr.mxu0 0.0
    %931 = vmatpush1.msra.mxu0 0.0
    %932 = vmatprep.subr.mxu0 0.0
    %933 = vmatpush1.msra.mxu0 0.0
    %934 = vmatprep.subr.mxu0 0.0
    %935 = vmatpush1.msra.mxu0 0.0
    %936 = vmatprep.subr.mxu0 0.0
    %937 = vmatpush1.msra.mxu0 0.0
    %938 = vmatprep.subr.mxu0 0.0
    %939 = vmatpush1.msra.mxu0 0.0
    %940 = vmatprep.subr.mxu0 0.0
    %941 = vmatpush1.msra.mxu0 0.0
    %942 = vmatprep.subr.mxu0 0.0
    %943 = vmatpush1.msra.mxu0 0.0
    %944 = vmatprep.subr.mxu0 0.0
    %945 = vmatpush1.msra.mxu0 0.0
    %946 = vmatprep.subr.mxu0 0.0
    %947 = vmatpush1.msra.mxu0 0.0
    %948 = vmatprep.subr.mxu0 0.0
    %949 = vmatpush1.msra.mxu0 0.0
    %950 = vmatprep.subr.mxu0 0.0
    %951 = vmatpush1.msra.mxu0 0.0
    %952 = vmatprep.subr.mxu0 0.0
    %953 = vmatpush1.msra.mxu0 0.0
    %954 = vmatprep.subr.mxu0 0.0
    %955 = vmatpush1.msra.mxu0 0.0
    %956 = vmatprep.subr.mxu0 0.0
    %957 = vmatpush1.msra.mxu0 0.0
    %958 = vmatprep.subr.mxu0 0.0
    %959 = vmatpush1.msra.mxu0 0.0
    %960 = vmatprep.subr.mxu0 0.0
    %961 = vmatpush1.msra.mxu0 0.0
    %962 = vmatprep.subr.mxu0 0.0
    %963 = vmatpush1.msra.mxu0 0.0
    %964 = vmatprep.mubr.f32.mxu0 0.0
    %965 = vmatmul.mubr.f32.gmra.mrb[0].mxu0 %v898
    %v966 = vpop.f32.mrb[0].mxu0
    %v967 = vadd.f32 0.0, %v966
    %v968 = vpop.f32.mrb[0].mxu0
    %v969 = vadd.f32 0.0, %v968
    %970 = vdwg.mxu0
    %v973 = vrot.slane %v967, 4
    %v974 = vrot.slane %v969, 4
    %v977 = vadd.f32 %v893, %v973
    %v978 = vadd.f32 %v894, %v974
    %v979 = vxor.u32 %v977, 2147483648
    %v980 = vxor.u32 %v978, 2147483648
    %v981 = vmul.f32 %v979, 1.442695
    %v982 = vpow.pop %v981
    %v983 = vmul.f32 %v980, 1.442695
    %v984 = vpow.pop %v983
    %v985 = vadd.f32 %v982, 1.0
    %v986 = vadd.f32 %v984, 1.0
    %v987 = vrcp.pop %v985
    %v988 = vmul.f32 1.0, %v987
    %v989 = vrcp.pop %v986
    %v990 = vmul.f32 1.0, %v989
    %v991 = vtanh.pop %v978
    %v993 = vrot.slane %v884, 6
    %v995 = vmul.f32 %v988, %v993
    %v996 = vmul.f32 %v988, %v991
    %998 = vrot.lane.b32.xlu0 %v996, 64
    %v999 = vpop.permute.xlu0 %998
    %v1001 = vadd.f32 %v995, %v999
    %v1002 = vtanh.pop %v1001
    %v1003 = vmul.f32 %v990, %v1002
    %1005 = vrot.lane.b32.xlu0 %v1003, 64
    %v1006 = vpop.permute.xlu0 %1005
    %1008 = vst.msk [vmem:[#allocation3 + $0x8] sm:$0x30] %vm545, %v1006
    %1009 = vst.msk [vmem:[#allocation3 - $0x2] sm:$0x30] %vm547, %v1006
    %v1010 = vld [vmem:[#allocation2 + $0x10] sm:$0xc0]
    %v1011 = vld [vmem:[#allocation2 + $0x18] sm:$0xc0]
    %v1012 = vrot.slane %v1003, 4
    %1013 = vrot.lane.b32.xlu0 %v1012, 64
    %v1014 = vpop.permute.xlu0 %1013
    %v1015 = vsel %vm207, %v1014, 0
    %1017 = vmatprep.subr.mxu0 %v190
    %1018 = vmatpush1.msra.mxu0 %v189
    %1019 = vmatprep.subr.mxu0 %v192
    %1020 = vmatpush1.msra.mxu0 %v191
    %1021 = vmatprep.subr.mxu0 %v194
    %1022 = vmatpush1.msra.mxu0 %v193
    %1023 = vmatprep.subr.mxu0 %v196
    %1024 = vmatpush1.msra.mxu0 %v195
    %1025 = vmatprep.subr.mxu0 %v198
    %1026 = vmatpush1.msra.mxu0 %v197
    %1027 = vmatprep.subr.mxu0 %v200
    %1028 = vmatpush1.msra.mxu0 %v199
    %1029 = vmatprep.subr.mxu0 %v202
    %1030 = vmatpush1.msra.mxu0 %v201
    %1031 = vmatprep.subr.mxu0 %v204
    %1032 = vmatpush1.msra.mxu0 %v203
    %1033 = vmatprep.subr.mxu0 0.0
    %1034 = vmatpush1.msra.mxu0 0.0
    %1035 = vmatprep.subr.mxu0 0.0
    %1036 = vmatpush1.msra.mxu0 0.0
    %1037 = vmatprep.subr.mxu0 0.0
    %1038 = vmatpush1.msra.mxu0 0.0
    %1039 = vmatprep.subr.mxu0 0.0
    %1040 = vmatpush1.msra.mxu0 0.0
    %1041 = vmatprep.subr.mxu0 0.0
    %1042 = vmatpush1.msra.mxu0 0.0
    %1043 = vmatprep.subr.mxu0 0.0
    %1044 = vmatpush1.msra.mxu0 0.0
    %1045 = vmatprep.subr.mxu0 0.0
    %1046 = vmatpush1.msra.mxu0 0.0
    %1047 = vmatprep.subr.mxu0 0.0
    %1048 = vmatpush1.msra.mxu0 0.0
    %1049 = vmatprep.subr.mxu0 0.0
    %1050 = vmatpush1.msra.mxu0 0.0
    %1051 = vmatprep.subr.mxu0 0.0
    %1052 = vmatpush1.msra.mxu0 0.0
    %1053 = vmatprep.subr.mxu0 0.0
    %1054 = vmatpush1.msra.mxu0 0.0
    %1055 = vmatprep.subr.mxu0 0.0
    %1056 = vmatpush1.msra.mxu0 0.0
    %1057 = vmatprep.subr.mxu0 0.0
    %1058 = vmatpush1.msra.mxu0 0.0
    %1059 = vmatprep.subr.mxu0 0.0
    %1060 = vmatpush1.msra.mxu0 0.0
    %1061 = vmatprep.subr.mxu0 0.0
    %1062 = vmatpush1.msra.mxu0 0.0
    %1063 = vmatprep.subr.mxu0 0.0
    %1064 = vmatpush1.msra.mxu0 0.0
    %1065 = vmatprep.subr.mxu0 0.0
    %1066 = vmatpush1.msra.mxu0 0.0
    %1067 = vmatprep.subr.mxu0 0.0
    %1068 = vmatpush1.msra.mxu0 0.0
    %1069 = vmatprep.subr.mxu0 0.0
    %1070 = vmatpush1.msra.mxu0 0.0
    %1071 = vmatprep.subr.mxu0 0.0
    %1072 = vmatpush1.msra.mxu0 0.0
    %1073 = vmatprep.subr.mxu0 0.0
    %1074 = vmatpush1.msra.mxu0 0.0
    %1075 = vmatprep.subr.mxu0 0.0
    %1076 = vmatpush1.msra.mxu0 0.0
    %1077 = vmatprep.subr.mxu0 0.0
    %1078 = vmatpush1.msra.mxu0 0.0
    %1079 = vmatprep.subr.mxu0 0.0
    %1080 = vmatpush1.msra.mxu0 0.0
    %1081 = vmatprep.mubr.f32.mxu0 0.0
    %1082 = vmatmul.mubr.f32.gmra.mrb[0].mxu0 %v1015
    %v1083 = vpop.f32.mrb[0].mxu0
    %v1084 = vadd.f32 0.0, %v1083
    %v1085 = vpop.f32.mrb[0].mxu0
    %v1086 = vadd.f32 0.0, %v1085
    %1087 = vdwg.mxu0
    %v1090 = vrot.slane %v1084, 2
    %v1091 = vrot.slane %v1086, 2
    %v1094 = vadd.f32 %v1010, %v1090
    %v1095 = vadd.f32 %v1011, %v1091
    %v1096 = vxor.u32 %v1094, 2147483648
    %v1097 = vxor.u32 %v1095, 2147483648
    %v1098 = vmul.f32 %v1096, 1.442695
    %v1099 = vpow.pop %v1098
    %v1100 = vmul.f32 %v1097, 1.442695
    %v1101 = vpow.pop %v1100
    %v1102 = vadd.f32 %v1099, 1.0
    %v1103 = vadd.f32 %v1101, 1.0
    %v1104 = vrcp.pop %v1102
    %v1105 = vmul.f32 1.0, %v1104
    %v1106 = vrcp.pop %v1103
    %v1107 = vmul.f32 1.0, %v1106
    %v1108 = vtanh.pop %v1095
    %v1110 = vrot.slane %v1001, 6
    %v1112 = vmul.f32 %v1105, %v1110
    %v1113 = vmul.f32 %v1105, %v1108
    %1115 = vrot.lane.b32.xlu0 %v1113, 64
    %v1116 = vpop.permute.xlu0 %1115
    %v1118 = vadd.f32 %v1112, %v1116
    %v1119 = vtanh.pop %v1118
    %v1120 = vmul.f32 %v1107, %v1119
    %1122 = vrot.lane.b32.xlu0 %v1120, 64
    %v1123 = vpop.permute.xlu0 %1122
    %1125 = vst.msk [vmem:[#allocation3 + $0x8] sm:$0xc0] %vm664, %v1123
    %1126 = vst.msk [vmem:[#allocation3 - $0x6] sm:$0xc0] %vm666, %v1123
    %v1127 = vld [vmem:[#allocation3] sm:$0xff]
    %v1128 = vld [vmem:[#allocation3 + $0x8] sm:$0xff]
    %v1129 = vld [vmem:[#allocation10] sm:$0xff]
    %v1130 = vld [vmem:[#allocation10 + $0x8] sm:$0xff]
    %v1131 = vld [vmem:[#allocation10 + $0x10] sm:$0xff]
    %v1132 = vld [vmem:[#allocation10 + $0x18] sm:$0xff]
    %v1133 = vld [vmem:[#allocation10 + $0x20] sm:$0xff]
    %v1134 = vld [vmem:[#allocation10 + $0x28] sm:$0xff]
    %v1135 = vld [vmem:[#allocation10 + $0x30] sm:$0xff]
    %v1136 = vld [vmem:[#allocation10 + $0x38] sm:$0xff]
    %v1137 = vld [vmem:[%s5] sm:$0x1]
    %v1139 = vlaneseq
    %v1140 = vshrl.u32 %v1139, 7
    %v1141 = vsub.s32 0, %v1140
    %v1142 = vrot.slane %v1137, %v1141
    %v1145 = vsel %vm207, %v1127, 0
    %v1148 = vsel %vm207, %v1128, 0
    %1150 = vmatprep.subr.mxu0 0.0
    %1151 = vmatpush1.msra.mxu0 %v1129
    %1152 = vmatprep.subr.mxu0 0.0
    %1153 = vmatpush1.msra.mxu0 %v1130
    %1154 = vmatprep.subr.mxu0 0.0
    %1155 = vmatpush1.msra.mxu0 %v1131
    %1156 = vmatprep.subr.mxu0 0.0
    %1157 = vmatpush1.msra.mxu0 %v1132
    %1158 = vmatprep.subr.mxu0 0.0
    %1159 = vmatpush1.msra.mxu0 %v1133
    %1160 = vmatprep.subr.mxu0 0.0
    %1161 = vmatpush1.msra.mxu0 %v1134
    %1162 = vmatprep.subr.mxu0 0.0
    %1163 = vmatpush1.msra.mxu0 %v1135
    %1164 = vmatprep.subr.mxu0 0.0
    %1165 = vmatpush1.msra.mxu0 %v1136
    %1166 = vmatprep.subr.mxu0 0.0
    %1167 = vmatpush1.msra.mxu0 0.0
    %1168 = vmatprep.subr.mxu0 0.0
    %1169 = vmatpush1.msra.mxu0 0.0
    %1170 = vmatprep.subr.mxu0 0.0
    %1171 = vmatpush1.msra.mxu0 0.0
    %1172 = vmatprep.subr.mxu0 0.0
    %1173 = vmatpush1.msra.mxu0 0.0
    %1174 = vmatprep.subr.mxu0 0.0
    %1175 = vmatpush1.msra.mxu0 0.0
    %1176 = vmatprep.subr.mxu0 0.0
    %1177 = vmatpush1.msra.mxu0 0.0
    %1178 = vmatprep.subr.mxu0 0.0
    %1179 = vmatpush1.msra.mxu0 0.0
    %1180 = vmatprep.subr.mxu0 0.0
    %1181 = vmatpush1.msra.mxu0 0.0
    %1182 = vmatprep.subr.mxu0 0.0
    %1183 = vmatpush1.msra.mxu0 0.0
    %1184 = vmatprep.subr.mxu0 0.0
    %1185 = vmatpush1.msra.mxu0 0.0
    %1186 = vmatprep.subr.mxu0 0.0
    %1187 = vmatpush1.msra.mxu0 0.0
    %1188 = vmatprep.subr.mxu0 0.0
    %1189 = vmatpush1.msra.mxu0 0.0
    %1190 = vmatprep.subr.mxu0 0.0
    %1191 = vmatpush1.msra.mxu0 0.0
    %1192 = vmatprep.subr.mxu0 0.0
    %1193 = vmatpush1.msra.mxu0 0.0
    %1194 = vmatprep.subr.mxu0 0.0
    %1195 = vmatpush1.msra.mxu0 0.0
    %1196 = vmatprep.subr.mxu0 0.0
    %1197 = vmatpush1.msra.mxu0 0.0
    %1198 = vmatprep.subr.mxu0 0.0
    %1199 = vmatpush1.msra.mxu0 0.0
    %1200 = vmatprep.subr.mxu0 0.0
    %1201 = vmatpush1.msra.mxu0 0.0
    %1202 = vmatprep.subr.mxu0 0.0
    %1203 = vmatpush1.msra.mxu0 0.0
    %1204 = vmatprep.subr.mxu0 0.0
    %1205 = vmatpush1.msra.mxu0 0.0
    %1206 = vmatprep.subr.mxu0 0.0
    %1207 = vmatpush1.msra.mxu0 0.0
    %1208 = vmatprep.subr.mxu0 0.0
    %1209 = vmatpush1.msra.mxu0 0.0
    %1210 = vmatprep.subr.mxu0 0.0
    %1211 = vmatpush1.msra.mxu0 0.0
    %1212 = vmatprep.subr.mxu0 0.0
    %1213 = vmatpush1.msra.mxu0 0.0
    %1214 = vmatprep.mubr.f32.mxu0 0.0
    %1215 = vmatmul.mubr.f32.gmra.mrb[0].mxu0 %v1145
    %v1216 = vpop.f32.mrb[0].mxu0
    %v1217 = vadd.f32 %v1142, %v1216
    %v1218 = vpop.f32.mrb[0].mxu0
    %1219 = vmatprep.mubr.f32.mxu0 0.0
    %1220 = vmatmul.mubr.f32.gmra.mrb[0].mxu0 %v1148
    %v1221 = vpop.f32.mrb[0].mxu0
    %v1222 = vadd.f32 %v1142, %v1221
    %v1223 = vpop.f32.mrb[0].mxu0
    %1224 = vdwg.mxu0
    %1225 = vst [vmem:[#allocation12] sm:$0xff] %v1217
    %1226 = vst [vmem:[#allocation12 + $0x8] sm:$0xff] %v1222
    // Predicated region
    $region42: #{tpu_custom_call.1} parent=1 // pred_check
      _
    $region43: #{tpu_custom_call.1} parent=1 // pred_check_branch
      %1228 = sbr.rel (0) target = $region45
    $region44: #{tpu_custom_call.1} parent=1 // pred_region
      %s1230 = ssub.s32 256, 256
      %1231 = vsyncadd [#allocation6], %s1230
      %s1232 = sshll.u32 [#allocation12], 4
      %s1233 = int_to_ptr.vmem [resolvable:$true] %s1232
      %1238 = dma.vmem_to_hbm [thread:$0]  %s1233, 256, %s6, [#allocation6], 128, 128, 8
    $region45: #{tpu_custom_call.1} parent=1 // pred_fallthru
      _
    // Predicated region
    $region46: #{tpu_custom_call.1} parent=1 // pred_check
      _
    $region47: #{tpu_custom_call.1} parent=1 // pred_check_branch
      %1240 = sbr.rel (0) target = $region49
    $region48: #{tpu_custom_call.1} parent=1 // pred_region
      %1241 = dma.done [#allocation6], 256
    $region49: #{tpu_custom_call.1} parent=1 // pred_fallthru
      _
    %1242 = vsyncpa [#allocation5], 1
    %1243 = vsyncpa [#allocation8], 1
    %1244 = vsyncpa [#allocation11], 1
    %1245 = vsyncpa [#allocation6], 1

</llo_original>
